<compile_context>
chip_gen: v6e
topology: v6e:2x2x1
jax: 0.10.0
libtpu: 0.0.40
codegen_flags: <defaults>
</compile_context>

<pallas_src>
import jax
import jax.numpy as jnp
from jax.experimental import pallas as pl

# ----------------------------- configuration -----------------------------
B = 2            # batch
N = 64           # num_point (vertices of the reference mesh)
C = 9            # per-vertex feature dim (fixed to 9 by the module)
H = 32           # geo_hidden_dim
CB = C * B       # fused channel-major row dim used inside the kernel
CN = C * N       # flattened per-batch feature length (channel-major)
DTYPE = jnp.float32


# ------------------------------ Pallas kernel ------------------------------
def _geovae_kernel(x_ref, eps_ref, slab_ref, gcn_wb_ref, wdec1_ref,
                   zml_ref, out_ref):
    """Entire GeoVAE forward (whole batch) in one grid-less invocation.

    Activation layout for the six GCN layers: (C*B, N), row r = c*B + b.
      x_ref      : (CB, N)            geo_input in kernel layout
      eps_ref    : (B, H)             reparameterization noise
      slab_ref   : (N + C*N + 1, 2H)  [ A_norm^T | flat mu|var weight | bias ]
      gcn_wb_ref : (6, CB, CB+1)      per-layer [kron(W^T, I_B) | bias column]
                                      (layers 0-2 encoder, 3-5 decoder)
      wdec1_ref  : (H, C*N)           decoder mlp1 weight (bias=False)
    Outputs:
      zml_ref    : (B, 3H)            [ z | mu | logvar ]
      out_ref    : (CB, N)            geo_output in kernel layout
    """
    f32 = jnp.float32
    a_t = slab_ref[0:N, :]                                 # (N, N) = A_norm^T

    def gcn3(h, first_layer, final_tanh):
        # Three GCN layers on the (CB, N) layout:
        #   aggregate:  h @ A_norm^T          -> (CB, N)
        #   transform:  kron(W^T, I_B) @ agg  -> (CB, N)   (+ per-row bias)
        for i in range(3):
            w = gcn_wb_ref[first_layer + i, :, 0:CB]       # (CB, CB)
            b = gcn_wb_ref[first_layer + i, :, CB:CB + 1]  # (CB, 1)
            agg = jnp.dot(h, a_t, preferred_element_type=f32)
            h = jnp.dot(w, agg, preferred_element_type=f32) + b
            if final_tanh and i == 2:
                h = jnp.tanh(h)
            else:
                h = jnp.maximum(h, 0.0)    # leaky_relu(slope=0) == relu
        return h

    # ------------------------------ encoder ------------------------------
    x3 = gcn3(x_ref[...], 0, final_tanh=False)             # (CB, N)

    # Fused mu|logvar head as ONE MXU matmul: flatten to a lane-contiguous
    # (B, C*N) slab (channel-major) and contract against the pre-permuted
    # (C*N, 2H) weight.  No 9-dot serial accumulation, no scratch stores.
    x3_flat = jnp.concatenate([x3[c * B:(c + 1) * B, :] for c in range(C)],
                              axis=1)                       # (B, C*N)
    w_head = slab_ref[N:N + CN, :]                          # (C*N, 2H)
    b_head = slab_ref[N + CN:N + CN + 1, :]                 # (1, 2H)
    mu_lv = jnp.dot(x3_flat, w_head, preferred_element_type=f32) + b_head
    mu = mu_lv[:, :H]
    logvar = mu_lv[:, H:]

    # -------------------------- reparameterize ---------------------------
    z = mu + eps_ref[...] * jnp.exp(0.5 * logvar)           # (B, H)
    zml_ref[...] = jnp.concatenate([z, mu_lv], axis=1)      # [z | mu | logvar]

    # ------------------------------ decoder ------------------------------
    # mlp1 (bias=False) as ONE matmul -> (B, C*N); rebuild the (CB, N) GCN
    # layout from cheap lane slices with a single concatenate.
    d_flat = jnp.dot(z, wdec1_ref[...], preferred_element_type=f32)    # (B, C*N)
    d_cb = jnp.concatenate([d_flat[:, c * N:(c + 1) * N] for c in range(C)],
                           axis=0)                          # (CB, N)

    out_ref[...] = gcn3(d_cb, 3, final_tanh=True)


# ------------------------------- wrapper -----------------------------------
def geovae_forward(kparams, geo_input, eps):
    """Returns (geo_z, geo_output, mu, logvar) — same as GeoVAE.forward."""
    # Host-side layout plumbing (tiny tensors, plain XLA, outside the kernel):
    # (B, N, C) -> (C, B, N) -> (C*B, N)
    x_cb = jnp.transpose(geo_input, (2, 0, 1)).reshape(CB, N)

    zml, y_cb = pl.pallas_call(
        _geovae_kernel,
        out_shape=(
            jax.ShapeDtypeStruct((B, 3 * H), DTYPE),   # [z | mu | logvar]
            jax.ShapeDtypeStruct((CB, N), DTYPE),      # geo_output (kernel layout)
        ),
    )(x_cb, eps, kparams["slab64"], kparams["gcn_wb"], kparams["wdec1_flat"])

    geo_z = zml[:, :H]
    mu = zml[:, H:2 * H]
    logvar = zml[:, 2 * H:]
    # (C*B, N) -> (C, B, N) -> (B, N, C)
    geo_output = y_cb.reshape(C, B, N).transpose(1, 2, 0)
    return geo_z, geo_output, mu, logvar


# --------------------------- parameter construction -----------------------
def make_norm_adjacency(n):
    """Ring graph + self loops, symmetric normalization D^-1/2 (A+I) D^-1/2."""
    idx = jnp.arange(n)
    a = jnp.zeros((n, n), DTYPE)
    a = a.at[idx, (idx + 1) % n].set(1.0)
    a = a.at[(idx + 1) % n, idx].set(1.0)
    a = a + jnp.eye(n, dtype=DTYPE)
    deg = jnp.sum(a, axis=1)
    d_inv_sqrt = 1.0 / jnp.sqrt(deg)
    return a * d_inv_sqrt[:, None] * d_inv_sqrt[None, :]


def init_raw_params(key):
    ks = jax.random.split(key, 9)
    s = 0.1
    p = {}
    p["enc_gcn_w"] = s * jax.random.normal(ks[0], (3, C, C), DTYPE)
    p["enc_gcn_b"] = s * jax.random.normal(ks[1], (3, C), DTYPE)
    p["w_mu"] = s * jax.random.normal(ks[2], (N * C, H), DTYPE)
    p["b_mu"] = s * jax.random.normal(ks[3], (H,), DTYPE)
    p["w_var"] = s * jax.random.normal(ks[4], (N * C, H), DTYPE)
    p["b_var"] = s * jax.random.normal(ks[5], (H,), DTYPE)
    p["w_dec1"] = s * jax.random.normal(ks[6], (H, N * C), DTYPE)  # bias=False
    p["dec_gcn_w"] = s * jax.random.normal(ks[7], (3, C, C), DTYPE)
    p["dec_gcn_b"] = s * jax.random.normal(ks[8], (3, C), DTYPE)
    return p


def prepare_kernel_params(raw, a_norm):
    """One-time (init) preprocessing: pre-block, pre-permute and pack params
    into 3 slabs so the kernel only does plain 2D matmuls / elementwise ops."""
    eye_b = jnp.eye(B, dtype=DTYPE)

    def layer_wb(w, b):
        # (C, C), (C,) -> (CB, CB+1) = [kron(W^T, I_B) | bias column]
        wblk = jnp.kron(w.T, eye_b)                          # (CB, CB)
        bcol = jnp.repeat(b, B).reshape(CB, 1)               # (CB, 1)
        return jnp.concatenate([wblk, bcol], axis=1)

    gcn_wb = jnp.stack(
        [layer_wb(raw["enc_gcn_w"][l], raw["enc_gcn_b"][l]) for l in range(3)]
        + [layer_wb(raw["dec_gcn_w"][l], raw["dec_gcn_b"][l]) for l in range(3)])

    # Head weight: PyTorch flat index is n*C + c; the kernel flattens
    # channel-major (c*N + n), so permute once here.
    w_cat = jnp.concatenate([raw["w_mu"], raw["w_var"]], axis=1)      # (N*C, 2H)
    w_head = w_cat.reshape(N, C, 2 * H).transpose(1, 0, 2).reshape(CN, 2 * H)
    b_head = jnp.concatenate([raw["b_mu"], raw["b_var"]])[None, :]    # (1, 2H)

    assert N == 2 * H, "slab packing below relies on N == 2*H (64 lanes)"
    slab64 = jnp.concatenate([a_norm.T, w_head, b_head], axis=0)      # (N+CN+1, 2H)

    # Decoder mlp1 weight (bias=False): (H, N*C) with index n*C+c -> (H, C*N).
    wdec1_flat = raw["w_dec1"].reshape(H, N, C).transpose(0, 2, 1).reshape(H, CN)

    return {"slab64": slab64, "gcn_wb": gcn_wb, "wdec1_flat": wdec1_flat}


# --------------------------- pure-JAX reference ----------------------------
def geovae_reference(raw, a_norm, geo_input, eps):
    hp = jax.lax.Precision.HIGHEST

    def gcn(x, w, b):  # x: (B, N, C)
        agg = jnp.einsum("nm,bmc->bnc", a_norm, x, precision=hp)
        return jnp.einsum("bnc,cd->bnd", agg, w, precision=hp) + b

    h = geo_input
    for l in range(3):
        h = jnp.maximum(gcn(h, raw["enc_gcn_w"][l], raw["enc_gcn_b"][l]), 0.0)
    flat = h.reshape(B, N * C)
    mu = jnp.dot(flat, raw["w_mu"], precision=hp) + raw["b_mu"]
    logvar = jnp.dot(flat, raw["w_var"], precision=hp) + raw["b_var"]
    z = mu + eps * jnp.exp(0.5 * logvar)
    d = jnp.dot(z, raw["w_dec1"], precision=hp).reshape(B, N, C)
    for l in range(2):
        d = jnp.maximum(gcn(d, raw["dec_gcn_w"][l], raw["dec_gcn_b"][l]), 0.0)
    out = jnp.tanh(gcn(d, raw["dec_gcn_w"][2], raw["dec_gcn_b"][2]))
    return z, out, mu, logvar


# --------------------------------- main ------------------------------------
if __name__ == "__main__":
    key = jax.random.PRNGKey(0)
    k_in, k_eps, k_par = jax.random.split(key, 3)

    raw = init_raw_params(k_par)
    a_norm = make_norm_adjacency(N)
    kparams = prepare_kernel_params(raw, a_norm)

    geo_input = jax.random.normal(k_in, (B, N, C), DTYPE)
    eps = jax.random.normal(k_eps, (B, H), DTYPE)   # randn_like(std), fixed seed

    fwd = jax.jit(geovae_forward)
    geo_z, geo_output, mu, logvar = jax.block_until_ready(
        fwd(kparams, geo_input, eps))

    # shape / range sanity
    assert geo_z.shape == (B, H) and mu.shape == (B, H) and logvar.shape == (B, H)
    assert geo_output.shape == (B, N, C)
    for t in (geo_z, geo_output, mu, logvar):
        assert bool(jnp.all(jnp.isfinite(t)))
    assert bool(jnp.all(jnp.abs(geo_output) <= 1.0 + 1e-6))   # tanh range

    # numerical check against a pure-JAX reference of the same forward pass
    rz, rout, rmu, rlv = jax.jit(geovae_reference)(raw, a_norm, geo_input, eps)
    for got, ref in ((geo_z, rz), (geo_output, rout), (mu, rmu), (logvar, rlv)):
        assert bool(jnp.allclose(got, ref, atol=2e-2, rtol=2e-2)), float(
            jnp.max(jnp.abs(got - ref)))

    print("KERNEL_OK")
</pallas_src>

<mosaic_0001>
module attributes {stable_mosaic.version = 11 : i64} {
  func.func @_geovae_kernel(%arg0: memref<18x64xf32, #tpu.memory_space<vmem>>, %arg1: memref<2x32xf32, #tpu.memory_space<vmem>>, %arg2: memref<641x64xf32, #tpu.memory_space<vmem>>, %arg3: memref<6x18x19xf32, #tpu.memory_space<vmem>>, %arg4: memref<32x576xf32, #tpu.memory_space<vmem>>, %arg5: memref<2x96xf32, #tpu.memory_space<vmem>>, %arg6: memref<18x64xf32, #tpu.memory_space<vmem>>) attributes {dimension_semantics = [], scalar_prefetch = 0 : i64, scratch_operands = 0 : i64, tpu.core_type = #tpu.core_type<tc>} {
    %c0 = arith.constant 0 : index
    %c0_0 = arith.constant 0 : index
    %0 = vector.load %arg2[%c0, %c0_0] : memref<641x64xf32, #tpu.memory_space<vmem>>, vector<64x64xf32>
    %c0_1 = arith.constant 0 : index
    %c0_2 = arith.constant 0 : index
    %1 = vector.load %arg0[%c0_1, %c0_2] : memref<18x64xf32, #tpu.memory_space<vmem>>, vector<18x64xf32>
    %c0_3 = arith.constant 0 : index
    %c0_4 = arith.constant 0 : index
    %c0_5 = arith.constant 0 : index
    %2 = vector.load %arg3[%c0_3, %c0_4, %c0_5] : memref<6x18x19xf32, #tpu.memory_space<vmem>>, vector<1x18x18xf32>
    %3 = vector.shape_cast %2 : vector<1x18x18xf32> to vector<18x18xf32>
    %c0_6 = arith.constant 0 : index
    %c0_7 = arith.constant 0 : index
    %c18 = arith.constant 18 : index
    %4 = vector.load %arg3[%c0_6, %c0_7, %c18] : memref<6x18x19xf32, #tpu.memory_space<vmem>>, vector<1x18x1xf32>
    %5 = vector.shape_cast %4 : vector<1x18x1xf32> to vector<18x1xf32>
    %cst = arith.constant dense<0.000000e+00> : vector<18x64xf32>
    %6 = tpu.matmul %1, %0, %cst {dimension_numbers = #tpu.dot_dimension_numbers<[1], [0], [0], [1], [0, 0, 1, 1], [], []>} : vector<18x64xf32>, vector<64x64xf32>, vector<18x64xf32> -> vector<18x64xf32>
    %cst_8 = arith.constant dense<0.000000e+00> : vector<18x64xf32>
    %7 = tpu.matmul %3, %6, %cst_8 {dimension_numbers = #tpu.dot_dimension_numbers<[1], [0], [0], [1], [0, 0, 1, 1], [], []>} : vector<18x18xf32>, vector<18x64xf32>, vector<18x64xf32> -> vector<18x64xf32>
    %8 = vector.broadcast %5 : vector<18x1xf32> to vector<18x64xf32>
    %9 = arith.addf %7, %8 : vector<18x64xf32>
    %cst_9 = arith.constant 0.000000e+00 : f32
    %10 = vector.broadcast %cst_9 : f32 to vector<18x64xf32>
    %11 = arith.maximumf %9, %10 : vector<18x64xf32>
    %c1 = arith.constant 1 : index
    %c0_10 = arith.constant 0 : index
    %c0_11 = arith.constant 0 : index
    %12 = vector.load %arg3[%c1, %c0_10, %c0_11] : memref<6x18x19xf32, #tpu.memory_space<vmem>>, vector<1x18x18xf32>
    %13 = vector.shape_cast %12 : vector<1x18x18xf32> to vector<18x18xf32>
    %c1_12 = arith.constant 1 : index
    %c0_13 = arith.constant 0 : index
    %c18_14 = arith.constant 18 : index
    %14 = vector.load %arg3[%c1_12, %c0_13, %c18_14] : memref<6x18x19xf32, #tpu.memory_space<vmem>>, vector<1x18x1xf32>
    %15 = vector.shape_cast %14 : vector<1x18x1xf32> to vector<18x1xf32>
    %cst_15 = arith.constant dense<0.000000e+00> : vector<18x64xf32>
    %16 = tpu.matmul %11, %0, %cst_15 {dimension_numbers = #tpu.dot_dimension_numbers<[1], [0], [0], [1], [0, 0, 1, 1], [], []>} : vector<18x64xf32>, vector<64x64xf32>, vector<18x64xf32> -> vector<18x64xf32>
    %cst_16 = arith.constant dense<0.000000e+00> : vector<18x64xf32>
    %17 = tpu.matmul %13, %16, %cst_16 {dimension_numbers = #tpu.dot_dimension_numbers<[1], [0], [0], [1], [0, 0, 1, 1], [], []>} : vector<18x18xf32>, vector<18x64xf32>, vector<18x64xf32> -> vector<18x64xf32>
    %18 = vector.broadcast %15 : vector<18x1xf32> to vector<18x64xf32>
    %19 = arith.addf %17, %18 : vector<18x64xf32>
    %cst_17 = arith.constant 0.000000e+00 : f32
    %20 = vector.broadcast %cst_17 : f32 to vector<18x64xf32>
    %21 = arith.maximumf %19, %20 : vector<18x64xf32>
    %c2 = arith.constant 2 : index
    %c0_18 = arith.constant 0 : index
    %c0_19 = arith.constant 0 : index
    %22 = vector.load %arg3[%c2, %c0_18, %c0_19] : memref<6x18x19xf32, #tpu.memory_space<vmem>>, vector<1x18x18xf32>
    %23 = vector.shape_cast %22 : vector<1x18x18xf32> to vector<18x18xf32>
    %c2_20 = arith.constant 2 : index
    %c0_21 = arith.constant 0 : index
    %c18_22 = arith.constant 18 : index
    %24 = vector.load %arg3[%c2_20, %c0_21, %c18_22] : memref<6x18x19xf32, #tpu.memory_space<vmem>>, vector<1x18x1xf32>
    %25 = vector.shape_cast %24 : vector<1x18x1xf32> to vector<18x1xf32>
    %cst_23 = arith.constant dense<0.000000e+00> : vector<18x64xf32>
    %26 = tpu.matmul %21, %0, %cst_23 {dimension_numbers = #tpu.dot_dimension_numbers<[1], [0], [0], [1], [0, 0, 1, 1], [], []>} : vector<18x64xf32>, vector<64x64xf32>, vector<18x64xf32> -> vector<18x64xf32>
    %cst_24 = arith.constant dense<0.000000e+00> : vector<18x64xf32>
    %27 = tpu.matmul %23, %26, %cst_24 {dimension_numbers = #tpu.dot_dimension_numbers<[1], [0], [0], [1], [0, 0, 1, 1], [], []>} : vector<18x18xf32>, vector<18x64xf32>, vector<18x64xf32> -> vector<18x64xf32>
    %28 = vector.broadcast %25 : vector<18x1xf32> to vector<18x64xf32>
    %29 = arith.addf %27, %28 : vector<18x64xf32>
    %cst_25 = arith.constant 0.000000e+00 : f32
    %30 = vector.broadcast %cst_25 : f32 to vector<18x64xf32>
    %31 = arith.maximumf %29, %30 : vector<18x64xf32>
    %32 = vector.extract_strided_slice %31 {offsets = [0, 0], sizes = [2, 64], strides = [1, 1]} : vector<18x64xf32> to vector<2x64xf32>
    %33 = vector.extract_strided_slice %31 {offsets = [2, 0], sizes = [2, 64], strides = [1, 1]} : vector<18x64xf32> to vector<2x64xf32>
    %34 = vector.extract_strided_slice %31 {offsets = [4, 0], sizes = [2, 64], strides = [1, 1]} : vector<18x64xf32> to vector<2x64xf32>
    %35 = vector.extract_strided_slice %31 {offsets = [6, 0], sizes = [2, 64], strides = [1, 1]} : vector<18x64xf32> to vector<2x64xf32>
    %36 = vector.extract_strided_slice %31 {offsets = [8, 0], sizes = [2, 64], strides = [1, 1]} : vector<18x64xf32> to vector<2x64xf32>
    %37 = vector.extract_strided_slice %31 {offsets = [10, 0], sizes = [2, 64], strides = [1, 1]} : vector<18x64xf32> to vector<2x64xf32>
    %38 = vector.extract_strided_slice %31 {offsets = [12, 0], sizes = [2, 64], strides = [1, 1]} : vector<18x64xf32> to vector<2x64xf32>
    %39 = vector.extract_strided_slice %31 {offsets = [14, 0], sizes = [2, 64], strides = [1, 1]} : vector<18x64xf32> to vector<2x64xf32>
    %40 = vector.extract_strided_slice %31 {offsets = [16, 0], sizes = [2, 64], strides = [1, 1]} : vector<18x64xf32> to vector<2x64xf32>
    %41 = tpu.concatenate %32, %33, %34, %35, %36, %37, %38, %39, %40 in 1 : vector<2x64xf32>, vector<2x64xf32>, vector<2x64xf32>, vector<2x64xf32>, vector<2x64xf32>, vector<2x64xf32>, vector<2x64xf32>, vector<2x64xf32>, vector<2x64xf32> -> vector<2x576xf32>
    %c64 = arith.constant 64 : index
    %c0_26 = arith.constant 0 : index
    %42 = vector.load %arg2[%c64, %c0_26] : memref<641x64xf32, #tpu.memory_space<vmem>>, vector<576x64xf32>
    %c640 = arith.constant 640 : index
    %c0_27 = arith.constant 0 : index
    %43 = vector.load %arg2[%c640, %c0_27] : memref<641x64xf32, #tpu.memory_space<vmem>>, vector<1x64xf32>
    %cst_28 = arith.constant dense<0.000000e+00> : vector<2x64xf32>
    %44 = tpu.matmul %41, %42, %cst_28 {dimension_numbers = #tpu.dot_dimension_numbers<[1], [0], [0], [1], [0, 0, 1, 1], [], []>} : vector<2x576xf32>, vector<576x64xf32>, vector<2x64xf32> -> vector<2x64xf32>
    %45 = vector.broadcast %43 : vector<1x64xf32> to vector<2x64xf32>
    %46 = arith.addf %44, %45 : vector<2x64xf32>
    %47 = vector.extract_strided_slice %46 {offsets = [0, 0], sizes = [2, 32], strides = [1, 1]} : vector<2x64xf32> to vector<2x32xf32>
    %48 = vector.extract_strided_slice %46 {offsets = [0, 32], sizes = [2, 32], strides = [1, 1]} : vector<2x64xf32> to vector<2x32xf32>
    %c0_29 = arith.constant 0 : index
    %c0_30 = arith.constant 0 : index
    %49 = vector.load %arg1[%c0_29, %c0_30] : memref<2x32xf32, #tpu.memory_space<vmem>>, vector<2x32xf32>
    %cst_31 = arith.constant 5.000000e-01 : f32
    %50 = vector.broadcast %cst_31 : f32 to vector<2x32xf32>
    %51 = arith.mulf %50, %48 : vector<2x32xf32>
    %52 = math.exp %51 : vector<2x32xf32>
    %53 = arith.mulf %49, %52 : vector<2x32xf32>
    %54 = arith.addf %47, %53 : vector<2x32xf32>
    %55 = tpu.concatenate %54, %46 in 1 : vector<2x32xf32>, vector<2x64xf32> -> vector<2x96xf32>
    %c0_32 = arith.constant 0 : index
    %c0_33 = arith.constant 0 : index
    %56 = vector.load %arg5[%c0_32, %c0_33] : memref<2x96xf32, #tpu.memory_space<vmem>>, vector<2x96xf32>
    tpu.vector_store %arg5[%c0_32, %c0_33], %55 {strides = array<i32>} : memref<2x96xf32, #tpu.memory_space<vmem>>, vector<2x96xf32>,
    %c0_34 = arith.constant 0 : index
    %c0_35 = arith.constant 0 : index
    %57 = vector.load %arg4[%c0_34, %c0_35] : memref<32x576xf32, #tpu.memory_space<vmem>>, vector<32x576xf32>
    %cst_36 = arith.constant dense<0.000000e+00> : vector<2x576xf32>
    %58 = tpu.matmul %54, %57, %cst_36 {dimension_numbers = #tpu.dot_dimension_numbers<[1], [0], [0], [1], [0, 0, 1, 1], [], []>} : vector<2x32xf32>, vector<32x576xf32>, vector<2x576xf32> -> vector<2x576xf32>
    %59 = vector.extract_strided_slice %58 {offsets = [0, 0], sizes = [2, 64], strides = [1, 1]} : vector<2x576xf32> to vector<2x64xf32>
    %60 = vector.extract_strided_slice %58 {offsets = [0, 64], sizes = [2, 64], strides = [1, 1]} : vector<2x576xf32> to vector<2x64xf32>
    %61 = vector.extract_strided_slice %58 {offsets = [0, 128], sizes = [2, 64], strides = [1, 1]} : vector<2x576xf32> to vector<2x64xf32>
    %62 = vector.extract_strided_slice %58 {offsets = [0, 192], sizes = [2, 64], strides = [1, 1]} : vector<2x576xf32> to vector<2x64xf32>
    %63 = vector.extract_strided_slice %58 {offsets = [0, 256], sizes = [2, 64], strides = [1, 1]} : vector<2x576xf32> to vector<2x64xf32>
    %64 = vector.extract_strided_slice %58 {offsets = [0, 320], sizes = [2, 64], strides = [1, 1]} : vector<2x576xf32> to vector<2x64xf32>
    %65 = vector.extract_strided_slice %58 {offsets = [0, 384], sizes = [2, 64], strides = [1, 1]} : vector<2x576xf32> to vector<2x64xf32>
    %66 = vector.extract_strided_slice %58 {offsets = [0, 448], sizes = [2, 64], strides = [1, 1]} : vector<2x576xf32> to vector<2x64xf32>
    %67 = vector.extract_strided_slice %58 {offsets = [0, 512], sizes = [2, 64], strides = [1, 1]} : vector<2x576xf32> to vector<2x64xf32>
    %68 = tpu.concatenate %59, %60, %61, %62, %63, %64, %65, %66, %67 in 0 : vector<2x64xf32>, vector<2x64xf32>, vector<2x64xf32>, vector<2x64xf32>, vector<2x64xf32>, vector<2x64xf32>, vector<2x64xf32>, vector<2x64xf32>, vector<2x64xf32> -> vector<18x64xf32>
    %c3 = arith.constant 3 : index
    %c0_37 = arith.constant 0 : index
    %c0_38 = arith.constant 0 : index
    %69 = vector.load %arg3[%c3, %c0_37, %c0_38] : memref<6x18x19xf32, #tpu.memory_space<vmem>>, vector<1x18x18xf32>
    %70 = vector.shape_cast %69 : vector<1x18x18xf32> to vector<18x18xf32>
    %c3_39 = arith.constant 3 : index
    %c0_40 = arith.constant 0 : index
    %c18_41 = arith.constant 18 : index
    %71 = vector.load %arg3[%c3_39, %c0_40, %c18_41] : memref<6x18x19xf32, #tpu.memory_space<vmem>>, vector<1x18x1xf32>
    %72 = vector.shape_cast %71 : vector<1x18x1xf32> to vector<18x1xf32>
    %cst_42 = arith.constant dense<0.000000e+00> : vector<18x64xf32>
    %73 = tpu.matmul %68, %0, %cst_42 {dimension_numbers = #tpu.dot_dimension_numbers<[1], [0], [0], [1], [0, 0, 1, 1], [], []>} : vector<18x64xf32>, vector<64x64xf32>, vector<18x64xf32> -> vector<18x64xf32>
    %cst_43 = arith.constant dense<0.000000e+00> : vector<18x64xf32>
    %74 = tpu.matmul %70, %73, %cst_43 {dimension_numbers = #tpu.dot_dimension_numbers<[1], [0], [0], [1], [0, 0, 1, 1], [], []>} : vector<18x18xf32>, vector<18x64xf32>, vector<18x64xf32> -> vector<18x64xf32>
    %75 = vector.broadcast %72 : vector<18x1xf32> to vector<18x64xf32>
    %76 = arith.addf %74, %75 : vector<18x64xf32>
    %cst_44 = arith.constant 0.000000e+00 : f32
    %77 = vector.broadcast %cst_44 : f32 to vector<18x64xf32>
    %78 = arith.maximumf %76, %77 : vector<18x64xf32>
    %c4 = arith.constant 4 : index
    %c0_45 = arith.constant 0 : index
    %c0_46 = arith.constant 0 : index
    %79 = vector.load %arg3[%c4, %c0_45, %c0_46] : memref<6x18x19xf32, #tpu.memory_space<vmem>>, vector<1x18x18xf32>
    %80 = vector.shape_cast %79 : vector<1x18x18xf32> to vector<18x18xf32>
    %c4_47 = arith.constant 4 : index
    %c0_48 = arith.constant 0 : index
    %c18_49 = arith.constant 18 : index
    %81 = vector.load %arg3[%c4_47, %c0_48, %c18_49] : memref<6x18x19xf32, #tpu.memory_space<vmem>>, vector<1x18x1xf32>
    %82 = vector.shape_cast %81 : vector<1x18x1xf32> to vector<18x1xf32>
    %cst_50 = arith.constant dense<0.000000e+00> : vector<18x64xf32>
    %83 = tpu.matmul %78, %0, %cst_50 {dimension_numbers = #tpu.dot_dimension_numbers<[1], [0], [0], [1], [0, 0, 1, 1], [], []>} : vector<18x64xf32>, vector<64x64xf32>, vector<18x64xf32> -> vector<18x64xf32>
    %cst_51 = arith.constant dense<0.000000e+00> : vector<18x64xf32>
    %84 = tpu.matmul %80, %83, %cst_51 {dimension_numbers = #tpu.dot_dimension_numbers<[1], [0], [0], [1], [0, 0, 1, 1], [], []>} : vector<18x18xf32>, vector<18x64xf32>, vector<18x64xf32> -> vector<18x64xf32>
    %85 = vector.broadcast %82 : vector<18x1xf32> to vector<18x64xf32>
    %86 = arith.addf %84, %85 : vector<18x64xf32>
    %cst_52 = arith.constant 0.000000e+00 : f32
    %87 = vector.broadcast %cst_52 : f32 to vector<18x64xf32>
    %88 = arith.maximumf %86, %87 : vector<18x64xf32>
    %c5 = arith.constant 5 : index
    %c0_53 = arith.constant 0 : index
    %c0_54 = arith.constant 0 : index
    %89 = vector.load %arg3[%c5, %c0_53, %c0_54] : memref<6x18x19xf32, #tpu.memory_space<vmem>>, vector<1x18x18xf32>
    %90 = vector.shape_cast %89 : vector<1x18x18xf32> to vector<18x18xf32>
    %c5_55 = arith.constant 5 : index
    %c0_56 = arith.constant 0 : index
    %c18_57 = arith.constant 18 : index
    %91 = vector.load %arg3[%c5_55, %c0_56, %c18_57] : memref<6x18x19xf32, #tpu.memory_space<vmem>>, vector<1x18x1xf32>
    %92 = vector.shape_cast %91 : vector<1x18x1xf32> to vector<18x1xf32>
    %cst_58 = arith.constant dense<0.000000e+00> : vector<18x64xf32>
    %93 = tpu.matmul %88, %0, %cst_58 {dimension_numbers = #tpu.dot_dimension_numbers<[1], [0], [0], [1], [0, 0, 1, 1], [], []>} : vector<18x64xf32>, vector<64x64xf32>, vector<18x64xf32> -> vector<18x64xf32>
    %cst_59 = arith.constant dense<0.000000e+00> : vector<18x64xf32>
    %94 = tpu.matmul %90, %93, %cst_59 {dimension_numbers = #tpu.dot_dimension_numbers<[1], [0], [0], [1], [0, 0, 1, 1], [], []>} : vector<18x18xf32>, vector<18x64xf32>, vector<18x64xf32> -> vector<18x64xf32>
    %95 = vector.broadcast %92 : vector<18x1xf32> to vector<18x64xf32>
    %96 = arith.addf %94, %95 : vector<18x64xf32>
    %97 = math.tanh %96 : vector<18x64xf32>
    %c0_60 = arith.constant 0 : index
    %c0_61 = arith.constant 0 : index
    %98 = vector.load %arg6[%c0_60, %c0_61] : memref<18x64xf32, #tpu.memory_space<vmem>>, vector<18x64xf32>
    tpu.vector_store %arg6[%c0_60, %c0_61], %97 {strides = array<i32>} : memref<18x64xf32, #tpu.memory_space<vmem>>, vector<18x64xf32>,
    return
  }
}

</mosaic_0001>

<llo_original>
// kernel: geovae_forward.1
$region0: #{geovae_forward.1}
  #allocation0 [shape = 'u32[]', space=smem, size = 0x4, offset = 0x4, fixed_abs, tag = 'smem constant byte address 0x4 - core index']
  #allocation1 [shape = 'u32[144,128]{1,0:T(1,128)}', space=vmem, size = 0x12000, scoped, tag = 'internal scratch']
  %s0 = inlined_call_operand.vmem [shape: f32[18,64], index: 0, kind: input, shape index: {}]
  %s1 = inlined_call_operand.vmem [shape: f32[2,32], index: 1, kind: input, shape index: {}]
  %s2 = inlined_call_operand.vmem [shape: f32[641,64], index: 2, kind: input, shape index: {}]
  %s3 = inlined_call_operand.vmem [shape: f32[6,18,19], index: 3, kind: input, shape index: {}]
  %s4 = inlined_call_operand.vmem [shape: f32[32,576], index: 4, kind: input, shape index: {}]
  %s5 = inlined_call_operand.vmem [shape: f32[2,96], index: 5, kind: output, shape index: {0}]
  %s6 = inlined_call_operand.vmem [shape: f32[18,64], index: 6, kind: output, shape index: {1}]
  %7 = xla_tuple %s5, %s6
  %s8 = sld [smem:[#allocation0]]
  $region38: #{geovae_forward.1} parent=0
    _
  %s10 = ssub.s32 1, %s8
  %s11 = scalar_select 0, %s10, %s8
  // Predicated region
  $region2: #{geovae_forward.1} parent=0 // pred_check
    _
  $region3: #{geovae_forward.1} parent=0 // pred_check_branch
    %13 = sbr.rel (0) target = $region5
  $region4: #{geovae_forward.1} parent=0 // pred_region
    _
  $region5: #{geovae_forward.1} parent=0 // pred_fallthru
    _
  // Predicated region
  $region6: #{geovae_forward.1} parent=0 // pred_check
    _
  $region7: #{geovae_forward.1} parent=0 // pred_check_branch
    %15 = sbr.rel (0) target = $region9
  $region8: #{geovae_forward.1} parent=0 // pred_region
    _
  $region9: #{geovae_forward.1} parent=0 // pred_fallthru
    _
  // Predicated region
  $region10: #{geovae_forward.1} parent=0 // pred_check
    _
  $region11: #{geovae_forward.1} parent=0 // pred_check_branch
    %17 = sbr.rel (0) target = $region13
  $region12: #{geovae_forward.1} parent=0 // pred_region
    _
  $region13: #{geovae_forward.1} parent=0 // pred_fallthru
    _
  // Predicated region
  $region14: #{geovae_forward.1} parent=0 // pred_check
    _
  $region15: #{geovae_forward.1} parent=0 // pred_check_branch
    %19 = sbr.rel (0) target = $region17
  $region16: #{geovae_forward.1} parent=0 // pred_region
    _
  $region17: #{geovae_forward.1} parent=0 // pred_fallthru
    _
  // Predicated region
  $region18: #{geovae_forward.1} parent=0 // pred_check
    _
  $region19: #{geovae_forward.1} parent=0 // pred_check_branch
    %21 = sbr.rel (0) target = $region21
  $region20: #{geovae_forward.1} parent=0 // pred_region
    _
  $region21: #{geovae_forward.1} parent=0 // pred_fallthru
    _
  %v22 = vld [vmem:[%s2] sm:$0xff]
  %v23 = vld [vmem:[%s2 + $0x8] sm:$0xff]
  %v24 = vld [vmem:[%s2 + $0x10] sm:$0xff]
  %v25 = vld [vmem:[%s2 + $0x18] sm:$0xff]
  %v26 = vld [vmem:[%s2 + $0x20] sm:$0xff]
  %v27 = vld [vmem:[%s2 + $0x28] sm:$0xff]
  %v28 = vld [vmem:[%s2 + $0x30] sm:$0xff]
  %v29 = vld [vmem:[%s2 + $0x38] sm:$0xff]
  %v30 = vld [vmem:[%s0] sm:$0xff]
  %v31 = vld [vmem:[%s0 + $0x8] sm:$0xff]
  %v32 = vld [vmem:[%s0 + $0x10] sm:$0x3]
  %v33 = vld [vmem:[%s3] sm:$0xff]
  %v34 = vld [vmem:[%s3 + $0x8] sm:$0xff]
  %v35 = vld [vmem:[%s3 + $0x10] sm:$0x3]
  %vm36 = vcmask 523264
  %v38 = vsel %vm36, %v30, 0
  %v41 = vsel %vm36, %v31, 0
  %v44 = vsel %vm36, %v32, 0
  %46 = vmatprep.subr.mxu0 0.0
  %47 = vmatpush1.msra.mxu0 0.0
  %48 = vmatprep.subr.mxu0 0.0
  %49 = vmatpush1.msra.mxu0 0.0
  %50 = vmatprep.subr.mxu0 0.0
  %51 = vmatpush1.msra.mxu0 0.0
  %52 = vmatprep.subr.mxu0 0.0
  %53 = vmatpush1.msra.mxu0 0.0
  %54 = vmatprep.subr.mxu0 0.0
  %55 = vmatpush1.msra.mxu0 0.0
  %56 = vmatprep.subr.mxu0 0.0
  %57 = vmatpush1.msra.mxu0 0.0
  %58 = vmatprep.subr.mxu0 0.0
  %59 = vmatpush1.msra.mxu0 0.0
  %60 = vmatprep.subr.mxu0 0.0
  %61 = vmatpush1.msra.mxu0 0.0
  %62 = vmatprep.subr.mxu0 0.0
  %63 = vmatpush1.msra.mxu0 %v29
  %64 = vmatprep.subr.mxu0 0.0
  %65 = vmatpush1.msra.mxu0 %v28
  %66 = vmatprep.subr.mxu0 0.0
  %67 = vmatpush1.msra.mxu0 %v27
  %68 = vmatprep.subr.mxu0 0.0
  %69 = vmatpush1.msra.mxu0 %v26
  %70 = vmatprep.subr.mxu0 0.0
  %71 = vmatpush1.msra.mxu0 %v25
  %72 = vmatprep.subr.mxu0 0.0
  %73 = vmatpush1.msra.mxu0 %v24
  %74 = vmatprep.subr.mxu0 0.0
  %75 = vmatpush1.msra.mxu0 %v23
  %76 = vmatprep.subr.mxu0 0.0
  %77 = vmatpush1.msra.mxu0 %v22
  %78 = vmatprep.subr.mxu0 0.0
  %79 = vmatpush2.msra.mxu0 0.0
  %80 = vmatprep.subr.mxu0 0.0
  %81 = vmatpush2.msra.mxu0 0.0
  %82 = vmatprep.subr.mxu0 0.0
  %83 = vmatpush2.msra.mxu0 0.0
  %84 = vmatprep.subr.mxu0 0.0
  %85 = vmatpush2.msra.mxu0 0.0
  %86 = vmatprep.subr.mxu0 0.0
  %87 = vmatpush2.msra.mxu0 0.0
  %88 = vmatprep.subr.mxu0 0.0
  %89 = vmatpush2.msra.mxu0 0.0
  %90 = vmatprep.subr.mxu0 0.0
  %91 = vmatpush2.msra.mxu0 0.0
  %92 = vmatprep.subr.mxu0 0.0
  %93 = vmatpush2.msra.mxu0 0.0
  %94 = vmatprep.subr.mxu0 0.0
  %95 = vmatpush2.msra.mxu0 0.0
  %96 = vmatprep.subr.mxu0 0.0
  %97 = vmatpush2.msra.mxu0 0.0
  %98 = vmatprep.subr.mxu0 0.0
  %99 = vmatpush2.msra.mxu0 0.0
  %100 = vmatprep.subr.mxu0 0.0
  %101 = vmatpush2.msra.mxu0 0.0
  %102 = vmatprep.subr.mxu0 0.0
  %103 = vmatpush2.msra.mxu0 0.0
  %104 = vmatprep.subr.mxu0 0.0
  %105 = vmatpush2.msra.mxu0 0.0
  %106 = vmatprep.subr.mxu0 0.0
  %107 = vmatpush2.msra.mxu0 0.0
  %108 = vmatprep.subr.mxu0 0.0
  %109 = vmatpush2.msra.mxu0 0.0
  %110 = vmatprep.mubr.f32.mxu0 0.0
  %111 = vmatmul.mubr.f32.gmra.mxu0 %v38
  %v112 = vpop.f32.mrf.mxu0
  %v113 = vadd.f32 0.0, %v112
  %v114 = vpop.f32.mrf.mxu0
  %115 = vmatprep.mubr.f32.mxu0 0.0
  %116 = vmatmul.mubr.f32.gmra.mxu0 %v41
  %v117 = vpop.f32.mrf.mxu0
  %v118 = vadd.f32 0.0, %v117
  %v119 = vpop.f32.mrf.mxu0
  %120 = vmatprep.mubr.f32.mxu0 0.0
  %121 = vmatmul.mubr.f32.gmra.mxu0 %v44
  %v122 = vpop.f32.mrf.mxu0
  %v123 = vadd.f32 0.0, %v122
  %v124 = vpop.f32.mrf.mxu0
  %125 = vdwg.mxu0
  %127 = vset.pattern.permute.xlu0 18
  %128 = vperm.xlu0 %127, %v33
  %v129 = vpop.permute.xlu0 %128
  %132 = vset.pattern.permute.xlu0 18
  %133 = vperm.xlu0 %132, %v34
  %v134 = vpop.permute.xlu0 %133
  %137 = vset.pattern.permute.xlu0 18
  %138 = vperm.xlu0 %137, %v35
  %v139 = vpop.permute.xlu0 %138
  %vm141 = vcmask 146432
  %v142 = vsel %vm141, %v33, 0
  %v144 = vsel %vm141, %v34, 0
  %v146 = vsel %vm141, %v35, 0
  %vm148 = vcmask 1041408
  %v150 = vsel %vm148, %v123, 0
  %152 = vmatprep.subr.mxu0 0.0
  %153 = vmatpush1.msra.mxu0 0.0
  %154 = vmatprep.subr.mxu0 0.0
  %155 = vmatpush1.msra.mxu0 0.0
  %156 = vmatprep.subr.mxu0 0.0
  %157 = vmatpush1.msra.mxu0 0.0
  %158 = vmatprep.subr.mxu0 0.0
  %159 = vmatpush1.msra.mxu0 0.0
  %160 = vmatprep.subr.mxu0 0.0
  %161 = vmatpush1.msra.mxu0 0.0
  %162 = vmatprep.subr.mxu0 0.0
  %163 = vmatpush1.msra.mxu0 0.0
  %164 = vmatprep.subr.mxu0 0.0
  %165 = vmatpush1.msra.mxu0 0.0
  %166 = vmatprep.subr.mxu0 0.0
  %167 = vmatpush1.msra.mxu0 0.0
  %168 = vmatprep.subr.mxu0 0.0
  %169 = vmatpush1.msra.mxu0 0.0
  %170 = vmatprep.subr.mxu0 0.0
  %171 = vmatpush1.msra.mxu0 0.0
  %172 = vmatprep.subr.mxu0 0.0
  %173 = vmatpush1.msra.mxu0 0.0
  %174 = vmatprep.subr.mxu0 0.0
  %175 = vmatpush1.msra.mxu0 0.0
  %176 = vmatprep.subr.mxu0 0.0
  %177 = vmatpush1.msra.mxu0 0.0
  %178 = vmatprep.subr.mxu0 0.0
  %179 = vmatpush1.msra.mxu0 %v150
  %180 = vmatprep.subr.mxu0 0.0
  %181 = vmatpush1.msra.mxu0 %v118
  %182 = vmatprep.subr.mxu0 0.0
  %183 = vmatpush1.msra.mxu0 %v113
  %184 = vmatprep.subr.mxu0 0.0
  %185 = vmatpush2.msra.mxu0 0.0
  %186 = vmatprep.subr.mxu0 0.0
  %187 = vmatpush2.msra.mxu0 0.0
  %188 = vmatprep.subr.mxu0 0.0
  %189 = vmatpush2.msra.mxu0 0.0
  %190 = vmatprep.subr.mxu0 0.0
  %191 = vmatpush2.msra.mxu0 0.0
  %192 = vmatprep.subr.mxu0 0.0
  %193 = vmatpush2.msra.mxu0 0.0
  %194 = vmatprep.subr.mxu0 0.0
  %195 = vmatpush2.msra.mxu0 0.0
  %196 = vmatprep.subr.mxu0 0.0
  %197 = vmatpush2.msra.mxu0 0.0
  %198 = vmatprep.subr.mxu0 0.0
  %199 = vmatpush2.msra.mxu0 0.0
  %200 = vmatprep.subr.mxu0 0.0
  %201 = vmatpush2.msra.mxu0 0.0
  %202 = vmatprep.subr.mxu0 0.0
  %203 = vmatpush2.msra.mxu0 0.0
  %204 = vmatprep.subr.mxu0 0.0
  %205 = vmatpush2.msra.mxu0 0.0
  %206 = vmatprep.subr.mxu0 0.0
  %207 = vmatpush2.msra.mxu0 0.0
  %208 = vmatprep.subr.mxu0 0.0
  %209 = vmatpush2.msra.mxu0 0.0
  %210 = vmatprep.subr.mxu0 0.0
  %211 = vmatpush2.msra.mxu0 0.0
  %212 = vmatprep.subr.mxu0 0.0
  %213 = vmatpush2.msra.mxu0 0.0
  %214 = vmatprep.subr.mxu0 0.0
  %215 = vmatpush2.msra.mxu0 0.0
  %216 = vmatprep.mubr.f32.mxu0 0.0
  %217 = vmatmul.mubr.f32.gmra.mxu0 %v142
  %v218 = vpop.f32.mrf.mxu0
  %v219 = vadd.f32 %v129, %v218
  %v220 = vpop.f32.mrf.mxu0
  %221 = vmatprep.mubr.f32.mxu0 0.0
  %222 = vmatmul.mubr.f32.gmra.mxu0 %v144
  %v223 = vpop.f32.mrf.mxu0
  %v224 = vadd.f32 %v134, %v223
  %v225 = vpop.f32.mrf.mxu0
  %226 = vmatprep.mubr.f32.mxu0 0.0
  %227 = vmatmul.mubr.f32.gmra.mxu0 %v146
  %v228 = vpop.f32.mrf.mxu0
  %v229 = vadd.f32 %v139, %v228
  %v230 = vpop.f32.mrf.mxu0
  %231 = vdwg.mxu0
  %v232 = vmax.f32 %v219, 0.0
  %v233 = vmax.f32 %v224, 0.0
  %v234 = vmax.f32 %v229, 0.0
  %s235 = scalar_lea.vmem %s3, 24
  %v236 = vld [vmem:[%s235] sm:$0xff]
  %v237 = vld [vmem:[%s235 + $0x8] sm:$0xff]
  %v238 = vld [vmem:[%s235 + $0x10] sm:$0x3]
  %v240 = vsel %vm36, %v232, 0
  %v243 = vsel %vm36, %v233, 0
  %v246 = vsel %vm36, %v234, 0
  %248 = vmatprep.subr.mxu0 0.0
  %249 = vmatpush1.msra.mxu0 0.0
  %250 = vmatprep.subr.mxu0 0.0
  %251 = vmatpush1.msra.mxu0 0.0
  %252 = vmatprep.subr.mxu0 0.0
  %253 = vmatpush1.msra.mxu0 0.0
  %254 = vmatprep.subr.mxu0 0.0
  %255 = vmatpush1.msra.mxu0 0.0
  %256 = vmatprep.subr.mxu0 0.0
  %257 = vmatpush1.msra.mxu0 0.0
  %258 = vmatprep.subr.mxu0 0.0
  %259 = vmatpush1.msra.mxu0 0.0
  %260 = vmatprep.subr.mxu0 0.0
  %261 = vmatpush1.msra.mxu0 0.0
  %262 = vmatprep.subr.mxu0 0.0
  %263 = vmatpush1.msra.mxu0 0.0
  %264 = vmatprep.subr.mxu0 0.0
  %265 = vmatpush1.msra.mxu0 %v29
  %266 = vmatprep.subr.mxu0 0.0
  %267 = vmatpush1.msra.mxu0 %v28
  %268 = vmatprep.subr.mxu0 0.0
  %269 = vmatpush1.msra.mxu0 %v27
  %270 = vmatprep.subr.mxu0 0.0
  %271 = vmatpush1.msra.mxu0 %v26
  %272 = vmatprep.subr.mxu0 0.0
  %273 = vmatpush1.msra.mxu0 %v25
  %274 = vmatprep.subr.mxu0 0.0
  %275 = vmatpush1.msra.mxu0 %v24
  %276 = vmatprep.subr.mxu0 0.0
  %277 = vmatpush1.msra.mxu0 %v23
  %278 = vmatprep.subr.mxu0 0.0
  %279 = vmatpush1.msra.mxu0 %v22
  %280 = vmatprep.subr.mxu0 0.0
  %281 = vmatpush2.msra.mxu0 0.0
  %282 = vmatprep.subr.mxu0 0.0
  %283 = vmatpush2.msra.mxu0 0.0
  %284 = vmatprep.subr.mxu0 0.0
  %285 = vmatpush2.msra.mxu0 0.0
  %286 = vmatprep.subr.mxu0 0.0
  %287 = vmatpush2.msra.mxu0 0.0
  %288 = vmatprep.subr.mxu0 0.0
  %289 = vmatpush2.msra.mxu0 0.0
  %290 = vmatprep.subr.mxu0 0.0
  %291 = vmatpush2.msra.mxu0 0.0
  %292 = vmatprep.subr.mxu0 0.0
  %293 = vmatpush2.msra.mxu0 0.0
  %294 = vmatprep.subr.mxu0 0.0
  %295 = vmatpush2.msra.mxu0 0.0
  %296 = vmatprep.subr.mxu0 0.0
  %297 = vmatpush2.msra.mxu0 0.0
  %298 = vmatprep.subr.mxu0 0.0
  %299 = vmatpush2.msra.mxu0 0.0
  %300 = vmatprep.subr.mxu0 0.0
  %301 = vmatpush2.msra.mxu0 0.0
  %302 = vmatprep.subr.mxu0 0.0
  %303 = vmatpush2.msra.mxu0 0.0
  %304 = vmatprep.subr.mxu0 0.0
  %305 = vmatpush2.msra.mxu0 0.0
  %306 = vmatprep.subr.mxu0 0.0
  %307 = vmatpush2.msra.mxu0 0.0
  %308 = vmatprep.subr.mxu0 0.0
  %309 = vmatpush2.msra.mxu0 0.0
  %310 = vmatprep.subr.mxu0 0.0
  %311 = vmatpush2.msra.mxu0 0.0
  %312 = vmatprep.mubr.f32.mxu0 0.0
  %313 = vmatmul.mubr.f32.gmra.mxu0 %v240
  %v314 = vpop.f32.mrf.mxu0
  %v315 = vadd.f32 0.0, %v314
  %v316 = vpop.f32.mrf.mxu0
  %317 = vmatprep.mubr.f32.mxu0 0.0
  %318 = vmatmul.mubr.f32.gmra.mxu0 %v243
  %v319 = vpop.f32.mrf.mxu0
  %v320 = vadd.f32 0.0, %v319
  %v321 = vpop.f32.mrf.mxu0
  %322 = vmatprep.mubr.f32.mxu0 0.0
  %323 = vmatmul.mubr.f32.gmra.mxu0 %v246
  %v324 = vpop.f32.mrf.mxu0
  %v325 = vadd.f32 0.0, %v324
  %v326 = vpop.f32.mrf.mxu0
  %327 = vdwg.mxu0
  %329 = vset.pattern.permute.xlu0 18
  %330 = vperm.xlu0 %329, %v236
  %v331 = vpop.permute.xlu0 %330
  %334 = vset.pattern.permute.xlu0 18
  %335 = vperm.xlu0 %334, %v237
  %v336 = vpop.permute.xlu0 %335
  %339 = vset.pattern.permute.xlu0 18
  %340 = vperm.xlu0 %339, %v238
  %v341 = vpop.permute.xlu0 %340
  %v343 = vsel %vm141, %v236, 0
  %v345 = vsel %vm141, %v237, 0
  %v347 = vsel %vm141, %v238, 0
  %v350 = vsel %vm148, %v325, 0
  %352 = vmatprep.subr.mxu0 0.0
  %353 = vmatpush1.msra.mxu0 0.0
  %354 = vmatprep.subr.mxu0 0.0
  %355 = vmatpush1.msra.mxu0 0.0
  %356 = vmatprep.subr.mxu0 0.0
  %357 = vmatpush1.msra.mxu0 0.0
  %358 = vmatprep.subr.mxu0 0.0
  %359 = vmatpush1.msra.mxu0 0.0
  %360 = vmatprep.subr.mxu0 0.0
  %361 = vmatpush1.msra.mxu0 0.0
  %362 = vmatprep.subr.mxu0 0.0
  %363 = vmatpush1.msra.mxu0 0.0
  %364 = vmatprep.subr.mxu0 0.0
  %365 = vmatpush1.msra.mxu0 0.0
  %366 = vmatprep.subr.mxu0 0.0
  %367 = vmatpush1.msra.mxu0 0.0
  %368 = vmatprep.subr.mxu0 0.0
  %369 = vmatpush1.msra.mxu0 0.0
  %370 = vmatprep.subr.mxu0 0.0
  %371 = vmatpush1.msra.mxu0 0.0
  %372 = vmatprep.subr.mxu0 0.0
  %373 = vmatpush1.msra.mxu0 0.0
  %374 = vmatprep.subr.mxu0 0.0
  %375 = vmatpush1.msra.mxu0 0.0
  %376 = vmatprep.subr.mxu0 0.0
  %377 = vmatpush1.msra.mxu0 0.0
  %378 = vmatprep.subr.mxu0 0.0
  %379 = vmatpush1.msra.mxu0 %v350
  %380 = vmatprep.subr.mxu0 0.0
  %381 = vmatpush1.msra.mxu0 %v320
  %382 = vmatprep.subr.mxu0 0.0
  %383 = vmatpush1.msra.mxu0 %v315
  %384 = vmatprep.subr.mxu0 0.0
  %385 = vmatpush2.msra.mxu0 0.0
  %386 = vmatprep.subr.mxu0 0.0
  %387 = vmatpush2.msra.mxu0 0.0
  %388 = vmatprep.subr.mxu0 0.0
  %389 = vmatpush2.msra.mxu0 0.0
  %390 = vmatprep.subr.mxu0 0.0
  %391 = vmatpush2.msra.mxu0 0.0
  %392 = vmatprep.subr.mxu0 0.0
  %393 = vmatpush2.msra.mxu0 0.0
  %394 = vmatprep.subr.mxu0 0.0
  %395 = vmatpush2.msra.mxu0 0.0
  %396 = vmatprep.subr.mxu0 0.0
  %397 = vmatpush2.msra.mxu0 0.0
  %398 = vmatprep.subr.mxu0 0.0
  %399 = vmatpush2.msra.mxu0 0.0
  %400 = vmatprep.subr.mxu0 0.0
  %401 = vmatpush2.msra.mxu0 0.0
  %402 = vmatprep.subr.mxu0 0.0
  %403 = vmatpush2.msra.mxu0 0.0
  %404 = vmatprep.subr.mxu0 0.0
  %405 = vmatpush2.msra.mxu0 0.0
  %406 = vmatprep.subr.mxu0 0.0
  %407 = vmatpush2.msra.mxu0 0.0
  %408 = vmatprep.subr.mxu0 0.0
  %409 = vmatpush2.msra.mxu0 0.0
  %410 = vmatprep.subr.mxu0 0.0
  %411 = vmatpush2.msra.mxu0 0.0
  %412 = vmatprep.subr.mxu0 0.0
  %413 = vmatpush2.msra.mxu0 0.0
  %414 = vmatprep.subr.mxu0 0.0
  %415 = vmatpush2.msra.mxu0 0.0
  %416 = vmatprep.mubr.f32.mxu0 0.0
  %417 = vmatmul.mubr.f32.gmra.mxu0 %v343
  %v418 = vpop.f32.mrf.mxu0
  %v419 = vadd.f32 %v331, %v418
  %v420 = vpop.f32.mrf.mxu0
  %421 = vmatprep.mubr.f32.mxu0 0.0
  %422 = vmatmul.mubr.f32.gmra.mxu0 %v345
  %v423 = vpop.f32.mrf.mxu0
  %v424 = vadd.f32 %v336, %v423
  %v425 = vpop.f32.mrf.mxu0
  %426 = vmatprep.mubr.f32.mxu0 0.0
  %427 = vmatmul.mubr.f32.gmra.mxu0 %v347
  %v428 = vpop.f32.mrf.mxu0
  %v429 = vadd.f32 %v341, %v428
  %v430 = vpop.f32.mrf.mxu0
  %431 = vdwg.mxu0
  %v432 = vmax.f32 %v419, 0.0
  %v433 = vmax.f32 %v424, 0.0
  %v434 = vmax.f32 %v429, 0.0
  %s435 = scalar_lea.vmem %s3, 48
  %v436 = vld [vmem:[%s435] sm:$0xff]
  %v437 = vld [vmem:[%s435 + $0x8] sm:$0xff]
  %v438 = vld [vmem:[%s435 + $0x10] sm:$0x3]
  %v440 = vsel %vm36, %v432, 0
  %v443 = vsel %vm36, %v433, 0
  %v446 = vsel %vm36, %v434, 0
  %448 = vmatprep.subr.mxu0 0.0
  %449 = vmatpush1.msra.mxu0 0.0
  %450 = vmatprep.subr.mxu0 0.0
  %451 = vmatpush1.msra.mxu0 0.0
  %452 = vmatprep.subr.mxu0 0.0
  %453 = vmatpush1.msra.mxu0 0.0
  %454 = vmatprep.subr.mxu0 0.0
  %455 = vmatpush1.msra.mxu0 0.0
  %456 = vmatprep.subr.mxu0 0.0
  %457 = vmatpush1.msra.mxu0 0.0
  %458 = vmatprep.subr.mxu0 0.0
  %459 = vmatpush1.msra.mxu0 0.0
  %460 = vmatprep.subr.mxu0 0.0
  %461 = vmatpush1.msra.mxu0 0.0
  %462 = vmatprep.subr.mxu0 0.0
  %463 = vmatpush1.msra.mxu0 0.0
  %464 = vmatprep.subr.mxu0 0.0
  %465 = vmatpush1.msra.mxu0 %v29
  %466 = vmatprep.subr.mxu0 0.0
  %467 = vmatpush1.msra.mxu0 %v28
  %468 = vmatprep.subr.mxu0 0.0
  %469 = vmatpush1.msra.mxu0 %v27
  %470 = vmatprep.subr.mxu0 0.0
  %471 = vmatpush1.msra.mxu0 %v26
  %472 = vmatprep.subr.mxu0 0.0
  %473 = vmatpush1.msra.mxu0 %v25
  %474 = vmatprep.subr.mxu0 0.0
  %475 = vmatpush1.msra.mxu0 %v24
  %476 = vmatprep.subr.mxu0 0.0
  %477 = vmatpush1.msra.mxu0 %v23
  %478 = vmatprep.subr.mxu0 0.0
  %479 = vmatpush1.msra.mxu0 %v22
  %480 = vmatprep.subr.mxu0 0.0
  %481 = vmatpush2.msra.mxu0 0.0
  %482 = vmatprep.subr.mxu0 0.0
  %483 = vmatpush2.msra.mxu0 0.0
  %484 = vmatprep.subr.mxu0 0.0
  %485 = vmatpush2.msra.mxu0 0.0
  %486 = vmatprep.subr.mxu0 0.0
  %487 = vmatpush2.msra.mxu0 0.0
  %488 = vmatprep.subr.mxu0 0.0
  %489 = vmatpush2.msra.mxu0 0.0
  %490 = vmatprep.subr.mxu0 0.0
  %491 = vmatpush2.msra.mxu0 0.0
  %492 = vmatprep.subr.mxu0 0.0
  %493 = vmatpush2.msra.mxu0 0.0
  %494 = vmatprep.subr.mxu0 0.0
  %495 = vmatpush2.msra.mxu0 0.0
  %496 = vmatprep.subr.mxu0 0.0
  %497 = vmatpush2.msra.mxu0 0.0
  %498 = vmatprep.subr.mxu0 0.0
  %499 = vmatpush2.msra.mxu0 0.0
  %500 = vmatprep.subr.mxu0 0.0
  %501 = vmatpush2.msra.mxu0 0.0
  %502 = vmatprep.subr.mxu0 0.0
  %503 = vmatpush2.msra.mxu0 0.0
  %504 = vmatprep.subr.mxu0 0.0
  %505 = vmatpush2.msra.mxu0 0.0
  %506 = vmatprep.subr.mxu0 0.0
  %507 = vmatpush2.msra.mxu0 0.0
  %508 = vmatprep.subr.mxu0 0.0
  %509 = vmatpush2.msra.mxu0 0.0
  %510 = vmatprep.subr.mxu0 0.0
  %511 = vmatpush2.msra.mxu0 0.0
  %512 = vmatprep.mubr.f32.mxu0 0.0
  %513 = vmatmul.mubr.f32.gmra.mxu0 %v440
  %v514 = vpop.f32.mrf.mxu0
  %v515 = vadd.f32 0.0, %v514
  %v516 = vpop.f32.mrf.mxu0
  %517 = vmatprep.mubr.f32.mxu0 0.0
  %518 = vmatmul.mubr.f32.gmra.mxu0 %v443
  %v519 = vpop.f32.mrf.mxu0
  %v520 = vadd.f32 0.0, %v519
  %v521 = vpop.f32.mrf.mxu0
  %522 = vmatprep.mubr.f32.mxu0 0.0
  %523 = vmatmul.mubr.f32.gmra.mxu0 %v446
  %v524 = vpop.f32.mrf.mxu0
  %v525 = vadd.f32 0.0, %v524
  %v526 = vpop.f32.mrf.mxu0
  %527 = vdwg.mxu0
  %529 = vset.pattern.permute.xlu0 18
  %530 = vperm.xlu0 %529, %v436
  %v531 = vpop.permute.xlu0 %530
  %534 = vset.pattern.permute.xlu0 18
  %535 = vperm.xlu0 %534, %v437
  %v536 = vpop.permute.xlu0 %535
  %539 = vset.pattern.permute.xlu0 18
  %540 = vperm.xlu0 %539, %v438
  %v541 = vpop.permute.xlu0 %540
  %v543 = vsel %vm141, %v436, 0
  %v545 = vsel %vm141, %v437, 0
  %v547 = vsel %vm141, %v438, 0
  %v550 = vsel %vm148, %v525, 0
  %552 = vmatprep.subr.mxu0 0.0
  %553 = vmatpush1.msra.mxu0 0.0
  %554 = vmatprep.subr.mxu0 0.0
  %555 = vmatpush1.msra.mxu0 0.0
  %556 = vmatprep.subr.mxu0 0.0
  %557 = vmatpush1.msra.mxu0 0.0
  %558 = vmatprep.subr.mxu0 0.0
  %559 = vmatpush1.msra.mxu0 0.0
  %560 = vmatprep.subr.mxu0 0.0
  %561 = vmatpush1.msra.mxu0 0.0
  %562 = vmatprep.subr.mxu0 0.0
  %563 = vmatpush1.msra.mxu0 0.0
  %564 = vmatprep.subr.mxu0 0.0
  %565 = vmatpush1.msra.mxu0 0.0
  %566 = vmatprep.subr.mxu0 0.0
  %567 = vmatpush1.msra.mxu0 0.0
  %568 = vmatprep.subr.mxu0 0.0
  %569 = vmatpush1.msra.mxu0 0.0
  %570 = vmatprep.subr.mxu0 0.0
  %571 = vmatpush1.msra.mxu0 0.0
  %572 = vmatprep.subr.mxu0 0.0
  %573 = vmatpush1.msra.mxu0 0.0
  %574 = vmatprep.subr.mxu0 0.0
  %575 = vmatpush1.msra.mxu0 0.0
  %576 = vmatprep.subr.mxu0 0.0
  %577 = vmatpush1.msra.mxu0 0.0
  %578 = vmatprep.subr.mxu0 0.0
  %579 = vmatpush1.msra.mxu0 %v550
  %580 = vmatprep.subr.mxu0 0.0
  %581 = vmatpush1.msra.mxu0 %v520
  %582 = vmatprep.subr.mxu0 0.0
  %583 = vmatpush1.msra.mxu0 %v515
  %584 = vmatprep.subr.mxu0 0.0
  %585 = vmatpush2.msra.mxu0 0.0
  %586 = vmatprep.subr.mxu0 0.0
  %587 = vmatpush2.msra.mxu0 0.0
  %588 = vmatprep.subr.mxu0 0.0
  %589 = vmatpush2.msra.mxu0 0.0
  %590 = vmatprep.subr.mxu0 0.0
  %591 = vmatpush2.msra.mxu0 0.0
  %592 = vmatprep.subr.mxu0 0.0
  %593 = vmatpush2.msra.mxu0 0.0
  %594 = vmatprep.subr.mxu0 0.0
  %595 = vmatpush2.msra.mxu0 0.0
  %596 = vmatprep.subr.mxu0 0.0
  %597 = vmatpush2.msra.mxu0 0.0
  %598 = vmatprep.subr.mxu0 0.0
  %599 = vmatpush2.msra.mxu0 0.0
  %600 = vmatprep.subr.mxu0 0.0
  %601 = vmatpush2.msra.mxu0 0.0
  %602 = vmatprep.subr.mxu0 0.0
  %603 = vmatpush2.msra.mxu0 0.0
  %604 = vmatprep.subr.mxu0 0.0
  %605 = vmatpush2.msra.mxu0 0.0
  %606 = vmatprep.subr.mxu0 0.0
  %607 = vmatpush2.msra.mxu0 0.0
  %608 = vmatprep.subr.mxu0 0.0
  %609 = vmatpush2.msra.mxu0 0.0
  %610 = vmatprep.subr.mxu0 0.0
  %611 = vmatpush2.msra.mxu0 0.0
  %612 = vmatprep.subr.mxu0 0.0
  %613 = vmatpush2.msra.mxu0 0.0
  %614 = vmatprep.subr.mxu0 0.0
  %615 = vmatpush2.msra.mxu0 0.0
  %616 = vmatprep.mubr.f32.mxu0 0.0
  %617 = vmatmul.mubr.f32.gmra.mxu0 %v543
  %v618 = vpop.f32.mrf.mxu0
  %v619 = vadd.f32 %v531, %v618
  %v620 = vpop.f32.mrf.mxu0
  %621 = vmatprep.mubr.f32.mxu0 0.0
  %622 = vmatmul.mubr.f32.gmra.mxu0 %v545
  %v623 = vpop.f32.mrf.mxu0
  %v624 = vadd.f32 %v536, %v623
  %v625 = vpop.f32.mrf.mxu0
  %626 = vmatprep.mubr.f32.mxu0 0.0
  %627 = vmatmul.mubr.f32.gmra.mxu0 %v547
  %v628 = vpop.f32.mrf.mxu0
  %v629 = vadd.f32 %v541, %v628
  %v630 = vpop.f32.mrf.mxu0
  %631 = vdwg.mxu0
  %v632 = vmax.f32 %v619, 0.0
  %v633 = vmax.f32 %v624, 0.0
  %v634 = vmax.f32 %v629, 0.0
  %v636 = vrot.slane %v632, 2
  %637 = vrot.lane.b32.xlu0 %v636, 64
  %v638 = vpop.permute.xlu0 %637
  %v640 = vrot.slane %v632, 4
  %v642 = vrot.slane %v632, 6
  %643 = vrot.lane.b32.xlu0 %v642, 64
  %v644 = vpop.permute.xlu0 %643
  %v647 = vrot.slane %v633, 2
  %648 = vrot.lane.b32.xlu0 %v647, 64
  %v649 = vpop.permute.xlu0 %648
  %v651 = vrot.slane %v633, 4
  %v653 = vrot.slane %v633, 6
  %654 = vrot.lane.b32.xlu0 %v653, 64
  %v655 = vpop.permute.xlu0 %654
  %v657 = vsel %vm36, %v632, %v638
  %v658 = vsel %vm36, %v640, %v644
  %v659 = vsel %vm36, %v633, %v649
  %v660 = vsel %vm36, %v651, %v655
  %v661 = vld [vmem:[%s2 + $0x40] sm:$0xff]
  %v662 = vld [vmem:[%s2 + $0x48] sm:$0xff]
  %v663 = vld [vmem:[%s2 + $0x50] sm:$0xff]
  %v664 = vld [vmem:[%s2 + $0x58] sm:$0xff]
  %v665 = vld [vmem:[%s2 + $0x60] sm:$0xff]
  %v666 = vld [vmem:[%s2 + $0x68] sm:$0xff]
  %v667 = vld [vmem:[%s2 + $0x70] sm:$0xff]
  %v668 = vld [vmem:[%s2 + $0x78] sm:$0xff]
  %v669 = vld [vmem:[%s2 + $0x80] sm:$0xff]
  %v670 = vld [vmem:[%s2 + $0x88] sm:$0xff]
  %v671 = vld [vmem:[%s2 + $0x90] sm:$0xff]
  %v672 = vld [vmem:[%s2 + $0x98] sm:$0xff]
  %v673 = vld [vmem:[%s2 + $0xa0] sm:$0xff]
  %v674 = vld [vmem:[%s2 + $0xa8] sm:$0xff]
  %v675 = vld [vmem:[%s2 + $0xb0] sm:$0xff]
  %v676 = vld [vmem:[%s2 + $0xb8] sm:$0xff]
  %v677 = vld [vmem:[%s2 + $0xc0] sm:$0xff]
  %v678 = vld [vmem:[%s2 + $0xc8] sm:$0xff]
  %v679 = vld [vmem:[%s2 + $0xd0] sm:$0xff]
  %v680 = vld [vmem:[%s2 + $0xd8] sm:$0xff]
  %v681 = vld [vmem:[%s2 + $0xe0] sm:$0xff]
  %v682 = vld [vmem:[%s2 + $0xe8] sm:$0xff]
  %v683 = vld [vmem:[%s2 + $0xf0] sm:$0xff]
  %v684 = vld [vmem:[%s2 + $0xf8] sm:$0xff]
  %v685 = vld [vmem:[%s2 + $0x100] sm:$0xff]
  %v686 = vld [vmem:[%s2 + $0x108] sm:$0xff]
  %v687 = vld [vmem:[%s2 + $0x110] sm:$0xff]
  %v688 = vld [vmem:[%s2 + $0x118] sm:$0xff]
  %v689 = vld [vmem:[%s2 + $0x120] sm:$0xff]
  %v690 = vld [vmem:[%s2 + $0x128] sm:$0xff]
  %v691 = vld [vmem:[%s2 + $0x130] sm:$0xff]
  %v692 = vld [vmem:[%s2 + $0x138] sm:$0xff]
  %v693 = vld [vmem:[%s2 + $0x140] sm:$0xff]
  %v694 = vld [vmem:[%s2 + $0x148] sm:$0xff]
  %v695 = vld [vmem:[%s2 + $0x150] sm:$0xff]
  %v696 = vld [vmem:[%s2 + $0x158] sm:$0xff]
  %v697 = vld [vmem:[%s2 + $0x160] sm:$0xff]
  %v698 = vld [vmem:[%s2 + $0x168] sm:$0xff]
  %v699 = vld [vmem:[%s2 + $0x170] sm:$0xff]
  %v700 = vld [vmem:[%s2 + $0x178] sm:$0xff]
  %v701 = vld [vmem:[%s2 + $0x180] sm:$0xff]
  %v702 = vld [vmem:[%s2 + $0x188] sm:$0xff]
  %v703 = vld [vmem:[%s2 + $0x190] sm:$0xff]
  %v704 = vld [vmem:[%s2 + $0x198] sm:$0xff]
  %v705 = vld [vmem:[%s2 + $0x1a0] sm:$0xff]
  %v706 = vld [vmem:[%s2 + $0x1a8] sm:$0xff]
  %v707 = vld [vmem:[%s2 + $0x1b0] sm:$0xff]
  %v708 = vld [vmem:[%s2 + $0x1b8] sm:$0xff]
  %v709 = vld [vmem:[%s2 + $0x1c0] sm:$0xff]
  %v710 = vld [vmem:[%s2 + $0x1c8] sm:$0xff]
  %v711 = vld [vmem:[%s2 + $0x1d0] sm:$0xff]
  %v712 = vld [vmem:[%s2 + $0x1d8] sm:$0xff]
  %v713 = vld [vmem:[%s2 + $0x1e0] sm:$0xff]
  %v714 = vld [vmem:[%s2 + $0x1e8] sm:$0xff]
  %v715 = vld [vmem:[%s2 + $0x1f0] sm:$0xff]
  %v716 = vld [vmem:[%s2 + $0x1f8] sm:$0xff]
  %v717 = vld [vmem:[%s2 + $0x200] sm:$0xff]
  %v718 = vld [vmem:[%s2 + $0x208] sm:$0xff]
  %v719 = vld [vmem:[%s2 + $0x210] sm:$0xff]
  %v720 = vld [vmem:[%s2 + $0x218] sm:$0xff]
  %v721 = vld [vmem:[%s2 + $0x220] sm:$0xff]
  %v722 = vld [vmem:[%s2 + $0x228] sm:$0xff]
  %v723 = vld [vmem:[%s2 + $0x230] sm:$0xff]
  %v724 = vld [vmem:[%s2 + $0x238] sm:$0xff]
  %v725 = vld [vmem:[%s2 + $0x240] sm:$0xff]
  %v726 = vld [vmem:[%s2 + $0x248] sm:$0xff]
  %v727 = vld [vmem:[%s2 + $0x250] sm:$0xff]
  %v728 = vld [vmem:[%s2 + $0x258] sm:$0xff]
  %v729 = vld [vmem:[%s2 + $0x260] sm:$0xff]
  %v730 = vld [vmem:[%s2 + $0x268] sm:$0xff]
  %v731 = vld [vmem:[%s2 + $0x270] sm:$0xff]
  %v732 = vld [vmem:[%s2 + $0x278] sm:$0xff]
  %v733 = vld [vmem:[%s2 + $0x280] sm:$0x1]
  %v734 = vlaneseq
  %v735 = vshrl.u32 %v734, 7
  %v736 = vsub.s32 0, %v735
  %v737 = vrot.slane %v733, %v736
  %v739 = vsel %vm36, %v634, 0
  %741 = vmatprep.subr.mxu0 0.0
  %742 = vmatpush1.msra.mxu0 %v676
  %743 = vmatprep.subr.mxu0 0.0
  %744 = vmatpush1.msra.mxu0 %v675
  %745 = vmatprep.subr.mxu0 0.0
  %746 = vmatpush1.msra.mxu0 %v674
  %747 = vmatprep.subr.mxu0 0.0
  %748 = vmatpush1.msra.mxu0 %v673
  %749 = vmatprep.subr.mxu0 0.0
  %750 = vmatpush1.msra.mxu0 %v672
  %751 = vmatprep.subr.mxu0 0.0
  %752 = vmatpush1.msra.mxu0 %v671
  %753 = vmatprep.subr.mxu0 0.0
  %754 = vmatpush1.msra.mxu0 %v670
  %755 = vmatprep.subr.mxu0 0.0
  %756 = vmatpush1.msra.mxu0 %v669
  %757 = vmatprep.subr.mxu0 0.0
  %758 = vmatpush1.msra.mxu0 %v668
  %759 = vmatprep.subr.mxu0 0.0
  %760 = vmatpush1.msra.mxu0 %v667
  %761 = vmatprep.subr.mxu0 0.0
  %762 = vmatpush1.msra.mxu0 %v666
  %763 = vmatprep.subr.mxu0 0.0
  %764 = vmatpush1.msra.mxu0 %v665
  %765 = vmatprep.subr.mxu0 0.0
  %766 = vmatpush1.msra.mxu0 %v664
  %767 = vmatprep.subr.mxu0 0.0
  %768 = vmatpush1.msra.mxu0 %v663
  %769 = vmatprep.subr.mxu0 0.0
  %770 = vmatpush1.msra.mxu0 %v662
  %771 = vmatprep.subr.mxu0 0.0
  %772 = vmatpush1.msra.mxu0 %v661
  %773 = vmatprep.subr.mxu0 0.0
  %774 = vmatpush2.msra.mxu0 %v692
  %775 = vmatprep.subr.mxu0 0.0
  %776 = vmatpush2.msra.mxu0 %v691
  %777 = vmatprep.subr.mxu0 0.0
  %778 = vmatpush2.msra.mxu0 %v690
  %779 = vmatprep.subr.mxu0 0.0
  %780 = vmatpush2.msra.mxu0 %v689
  %781 = vmatprep.subr.mxu0 0.0
  %782 = vmatpush2.msra.mxu0 %v688
  %783 = vmatprep.subr.mxu0 0.0
  %784 = vmatpush2.msra.mxu0 %v687
  %785 = vmatprep.subr.mxu0 0.0
  %786 = vmatpush2.msra.mxu0 %v686
  %787 = vmatprep.subr.mxu0 0.0
  %788 = vmatpush2.msra.mxu0 %v685
  %789 = vmatprep.subr.mxu0 0.0
  %790 = vmatpush2.msra.mxu0 %v684
  %791 = vmatprep.subr.mxu0 0.0
  %792 = vmatpush2.msra.mxu0 %v683
  %793 = vmatprep.subr.mxu0 0.0
  %794 = vmatpush2.msra.mxu0 %v682
  %795 = vmatprep.subr.mxu0 0.0
  %796 = vmatpush2.msra.mxu0 %v681
  %797 = vmatprep.subr.mxu0 0.0
  %798 = vmatpush2.msra.mxu0 %v680
  %799 = vmatprep.subr.mxu0 0.0
  %800 = vmatpush2.msra.mxu0 %v679
  %801 = vmatprep.subr.mxu0 0.0
  %802 = vmatpush2.msra.mxu0 %v678
  %803 = vmatprep.subr.mxu0 0.0
  %804 = vmatpush2.msra.mxu0 %v677
  %805 = vmatprep.mubr.f32.mxu0 %v658
  %806 = vmatmul.mubr.f32.gmra.mxu0 %v657
  %v807 = vpop.f32.mrf.mxu0
  %v808 = vadd.f32 %v737, %v807
  %v809 = vpop.f32.mrf.mxu0
  %810 = vdwg.mxu0
  %811 = vmatprep.subr.mxu0 0.0
  %812 = vmatpush1.msra.mxu0 %v708
  %813 = vmatprep.subr.mxu0 0.0
  %814 = vmatpush1.msra.mxu0 %v707
  %815 = vmatprep.subr.mxu0 0.0
  %816 = vmatpush1.msra.mxu0 %v706
  %817 = vmatprep.subr.mxu0 0.0
  %818 = vmatpush1.msra.mxu0 %v705
  %819 = vmatprep.subr.mxu0 0.0
  %820 = vmatpush1.msra.mxu0 %v704
  %821 = vmatprep.subr.mxu0 0.0
  %822 = vmatpush1.msra.mxu0 %v703
  %823 = vmatprep.subr.mxu0 0.0
  %824 = vmatpush1.msra.mxu0 %v702
  %825 = vmatprep.subr.mxu0 0.0
  %826 = vmatpush1.msra.mxu0 %v701
  %827 = vmatprep.subr.mxu0 0.0
  %828 = vmatpush1.msra.mxu0 %v700
  %829 = vmatprep.subr.mxu0 0.0
  %830 = vmatpush1.msra.mxu0 %v699
  %831 = vmatprep.subr.mxu0 0.0
  %832 = vmatpush1.msra.mxu0 %v698
  %833 = vmatprep.subr.mxu0 0.0
  %834 = vmatpush1.msra.mxu0 %v697
  %835 = vmatprep.subr.mxu0 0.0
  %836 = vmatpush1.msra.mxu0 %v696
  %837 = vmatprep.subr.mxu0 0.0
  %838 = vmatpush1.msra.mxu0 %v695
  %839 = vmatprep.subr.mxu0 0.0
  %840 = vmatpush1.msra.mxu0 %v694
  %841 = vmatprep.subr.mxu0 0.0
  %842 = vmatpush1.msra.mxu0 %v693
  %843 = vmatprep.subr.mxu0 0.0
  %844 = vmatpush2.msra.mxu0 %v724
  %845 = vmatprep.subr.mxu0 0.0
  %846 = vmatpush2.msra.mxu0 %v723
  %847 = vmatprep.subr.mxu0 0.0
  %848 = vmatpush2.msra.mxu0 %v722
  %849 = vmatprep.subr.mxu0 0.0
  %850 = vmatpush2.msra.mxu0 %v721
  %851 = vmatprep.subr.mxu0 0.0
  %852 = vmatpush2.msra.mxu0 %v720
  %853 = vmatprep.subr.mxu0 0.0
  %854 = vmatpush2.msra.mxu0 %v719
  %855 = vmatprep.subr.mxu0 0.0
  %856 = vmatpush2.msra.mxu0 %v718
  %857 = vmatprep.subr.mxu0 0.0
  %858 = vmatpush2.msra.mxu0 %v717
  %859 = vmatprep.subr.mxu0 0.0
  %860 = vmatpush2.msra.mxu0 %v716
  %861 = vmatprep.subr.mxu0 0.0
  %862 = vmatpush2.msra.mxu0 %v715
  %863 = vmatprep.subr.mxu0 0.0
  %864 = vmatpush2.msra.mxu0 %v714
  %865 = vmatprep.subr.mxu0 0.0
  %866 = vmatpush2.msra.mxu0 %v713
  %867 = vmatprep.subr.mxu0 0.0
  %868 = vmatpush2.msra.mxu0 %v712
  %869 = vmatprep.subr.mxu0 0.0
  %870 = vmatpush2.msra.mxu0 %v711
  %871 = vmatprep.subr.mxu0 0.0
  %872 = vmatpush2.msra.mxu0 %v710
  %873 = vmatprep.subr.mxu0 0.0
  %874 = vmatpush2.msra.mxu0 %v709
  %875 = vmatprep.mubr.f32.mxu0 %v660
  %876 = vmatmul.mubr.f32.gmra.mxu0 %v659
  %v877 = vpop.f32.mrf.mxu0
  %v878 = vadd.f32 %v808, %v877
  %v879 = vpop.f32.mrf.mxu0
  %880 = vdwg.mxu0
  %881 = vmatprep.subr.mxu0 0.0
  %882 = vmatpush1.msra.mxu0 0.0
  %883 = vmatprep.subr.mxu0 0.0
  %884 = vmatpush1.msra.mxu0 0.0
  %885 = vmatprep.subr.mxu0 0.0
  %886 = vmatpush1.msra.mxu0 0.0
  %887 = vmatprep.subr.mxu0 0.0
  %888 = vmatpush1.msra.mxu0 0.0
  %889 = vmatprep.subr.mxu0 0.0
  %890 = vmatpush1.msra.mxu0 0.0
  %891 = vmatprep.subr.mxu0 0.0
  %892 = vmatpush1.msra.mxu0 0.0
  %893 = vmatprep.subr.mxu0 0.0
  %894 = vmatpush1.msra.mxu0 0.0
  %895 = vmatprep.subr.mxu0 0.0
  %896 = vmatpush1.msra.mxu0 0.0
  %897 = vmatprep.subr.mxu0 0.0
  %898 = vmatpush1.msra.mxu0 %v732
  %899 = vmatprep.subr.mxu0 0.0
  %900 = vmatpush1.msra.mxu0 %v731
  %901 = vmatprep.subr.mxu0 0.0
  %902 = vmatpush1.msra.mxu0 %v730
  %903 = vmatprep.subr.mxu0 0.0
  %904 = vmatpush1.msra.mxu0 %v729
  %905 = vmatprep.subr.mxu0 0.0
  %906 = vmatpush1.msra.mxu0 %v728
  %907 = vmatprep.subr.mxu0 0.0
  %908 = vmatpush1.msra.mxu0 %v727
  %909 = vmatprep.subr.mxu0 0.0
  %910 = vmatpush1.msra.mxu0 %v726
  %911 = vmatprep.subr.mxu0 0.0
  %912 = vmatpush1.msra.mxu0 %v725
  %913 = vmatprep.subr.mxu0 0.0
  %914 = vmatpush2.msra.mxu0 0.0
  %915 = vmatprep.subr.mxu0 0.0
  %916 = vmatpush2.msra.mxu0 0.0
  %917 = vmatprep.subr.mxu0 0.0
  %918 = vmatpush2.msra.mxu0 0.0
  %919 = vmatprep.subr.mxu0 0.0
  %920 = vmatpush2.msra.mxu0 0.0
  %921 = vmatprep.subr.mxu0 0.0
  %922 = vmatpush2.msra.mxu0 0.0
  %923 = vmatprep.subr.mxu0 0.0
  %924 = vmatpush2.msra.mxu0 0.0
  %925 = vmatprep.subr.mxu0 0.0
  %926 = vmatpush2.msra.mxu0 0.0
  %927 = vmatprep.subr.mxu0 0.0
  %928 = vmatpush2.msra.mxu0 0.0
  %929 = vmatprep.subr.mxu0 0.0
  %930 = vmatpush2.msra.mxu0 0.0
  %931 = vmatprep.subr.mxu0 0.0
  %932 = vmatpush2.msra.mxu0 0.0
  %933 = vmatprep.subr.mxu0 0.0
  %934 = vmatpush2.msra.mxu0 0.0
  %935 = vmatprep.subr.mxu0 0.0
  %936 = vmatpush2.msra.mxu0 0.0
  %937 = vmatprep.subr.mxu0 0.0
  %938 = vmatpush2.msra.mxu0 0.0
  %939 = vmatprep.subr.mxu0 0.0
  %940 = vmatpush2.msra.mxu0 0.0
  %941 = vmatprep.subr.mxu0 0.0
  %942 = vmatpush2.msra.mxu0 0.0
  %943 = vmatprep.subr.mxu0 0.0
  %944 = vmatpush2.msra.mxu0 0.0
  %945 = vmatprep.mubr.f32.mxu0 0.0
  %946 = vmatmul.mubr.f32.gmra.mxu0 %v739
  %v947 = vpop.f32.mrf.mxu0
  %v948 = vadd.f32 %v878, %v947
  %v949 = vpop.f32.mrf.mxu0
  %950 = vdwg.mxu0
  %v951 = vld [vmem:[%s1] sm:$0x3]
  %v952 = vmul.f32 %v948, 0.5
  %v953 = vmul.f32 %v952, 1.442695
  %v954 = vpow.pop %v953
  %956 = vrot.lane.b32.xlu0 %v954, 96
  %v957 = vpop.permute.xlu0 %956
  %v959 = vmul.f32 %v951, %v957
  %v960 = vadd.f32 %v948, %v959
  %962 = vrot.lane.b32.xlu0 %v948, 32
  %v963 = vpop.permute.xlu0 %962
  %vm965 = vcmask 261120
  %v966 = vsel %vm965, %v960, %v963
  %vm967 = vcmask 779264
  %968 = vst.msk [vmem:[%s5] sm:$0x3] %vm967, %v966
  %v969 = vld [vmem:[%s4] sm:$0xff]
  %v970 = vld [vmem:[%s4 + $0x8] sm:$0xff]
  %v971 = vld [vmem:[%s4 + $0x10] sm:$0xff]
  %v972 = vld [vmem:[%s4 + $0x18] sm:$0xff]
  %v973 = vld [vmem:[%s4 + $0x20] sm:$0xff]
  %v974 = vld [vmem:[%s4 + $0x28] sm:$0xff]
  %v975 = vld [vmem:[%s4 + $0x30] sm:$0xff]
  %v976 = vld [vmem:[%s4 + $0x38] sm:$0xff]
  %v977 = vld [vmem:[%s4 + $0x40] sm:$0xff]
  %v978 = vld [vmem:[%s4 + $0x48] sm:$0xff]
  %v979 = vld [vmem:[%s4 + $0x50] sm:$0xff]
  %v980 = vld [vmem:[%s4 + $0x58] sm:$0xff]
  %v981 = vld [vmem:[%s4 + $0x60] sm:$0xff]
  %v982 = vld [vmem:[%s4 + $0x68] sm:$0xff]
  %v983 = vld [vmem:[%s4 + $0x70] sm:$0xff]
  %v984 = vld [vmem:[%s4 + $0x78] sm:$0xff]
  %v985 = vld [vmem:[%s4 + $0x80] sm:$0xff]
  %v986 = vld [vmem:[%s4 + $0x88] sm:$0xff]
  %v987 = vld [vmem:[%s4 + $0x90] sm:$0xff]
  %v988 = vld [vmem:[%s4 + $0x98] sm:$0xff]
  %v990 = vsel %vm965, %v960, 0
  %992 = vmatprep.subr.mxu0 0.0
  %993 = vmatpush1.msra.mxu0 0.0
  %994 = vmatprep.subr.mxu0 0.0
  %995 = vmatpush1.msra.mxu0 0.0
  %996 = vmatprep.subr.mxu0 0.0
  %997 = vmatpush1.msra.mxu0 0.0
  %998 = vmatprep.subr.mxu0 0.0
  %999 = vmatpush1.msra.mxu0 0.0
  %1000 = vmatprep.subr.mxu0 0.0
  %1001 = vmatpush1.msra.mxu0 0.0
  %1002 = vmatprep.subr.mxu0 0.0
  %1003 = vmatpush1.msra.mxu0 0.0
  %1004 = vmatprep.subr.mxu0 0.0
  %1005 = vmatpush1.msra.mxu0 0.0
  %1006 = vmatprep.subr.mxu0 0.0
  %1007 = vmatpush1.msra.mxu0 0.0
  %1008 = vmatprep.subr.mxu0 0.0
  %1009 = vmatpush1.msra.mxu0 0.0
  %1010 = vmatprep.subr.mxu0 0.0
  %1011 = vmatpush1.msra.mxu0 0.0
  %1012 = vmatprep.subr.mxu0 0.0
  %1013 = vmatpush1.msra.mxu0 0.0
  %1014 = vmatprep.subr.mxu0 0.0
  %1015 = vmatpush1.msra.mxu0 0.0
  %1016 = vmatprep.subr.mxu0 %v985
  %1017 = vmatpush1.msra.mxu0 %v984
  %1018 = vmatprep.subr.mxu0 %v980
  %1019 = vmatpush1.msra.mxu0 %v979
  %1020 = vmatprep.subr.mxu0 %v975
  %1021 = vmatpush1.msra.mxu0 %v974
  %1022 = vmatprep.subr.mxu0 %v970
  %1023 = vmatpush1.msra.mxu0 %v969
  %1024 = vmatprep.subr.mxu0 0.0
  %1025 = vmatpush2.msra.mxu0 0.0
  %1026 = vmatprep.subr.mxu0 0.0
  %1027 = vmatpush2.msra.mxu0 0.0
  %1028 = vmatprep.subr.mxu0 0.0
  %1029 = vmatpush2.msra.mxu0 0.0
  %1030 = vmatprep.subr.mxu0 0.0
  %1031 = vmatpush2.msra.mxu0 0.0
  %1032 = vmatprep.subr.mxu0 0.0
  %1033 = vmatpush2.msra.mxu0 0.0
  %1034 = vmatprep.subr.mxu0 0.0
  %1035 = vmatpush2.msra.mxu0 0.0
  %1036 = vmatprep.subr.mxu0 0.0
  %1037 = vmatpush2.msra.mxu0 0.0
  %1038 = vmatprep.subr.mxu0 0.0
  %1039 = vmatpush2.msra.mxu0 0.0
  %1040 = vmatprep.subr.mxu0 0.0
  %1041 = vmatpush2.msra.mxu0 0.0
  %1042 = vmatprep.subr.mxu0 0.0
  %1043 = vmatpush2.msra.mxu0 0.0
  %1044 = vmatprep.subr.mxu0 0.0
  %1045 = vmatpush2.msra.mxu0 0.0
  %1046 = vmatprep.subr.mxu0 0.0
  %1047 = vmatpush2.msra.mxu0 0.0
  %1048 = vmatprep.subr.mxu0 0.0
  %1049 = vmatpush2.msra.mxu0 0.0
  %1050 = vmatprep.subr.mxu0 0.0
  %1051 = vmatpush2.msra.mxu0 0.0
  %1052 = vmatprep.subr.mxu0 0.0
  %1053 = vmatpush2.msra.mxu0 0.0
  %1054 = vmatprep.subr.mxu0 0.0
  %1055 = vmatpush2.msra.mxu0 0.0
  %1056 = vmatprep.mubr.f32.mxu0 0.0
  %1057 = vmatmul.mubr.f32.gmra.mxu0 %v990
  %v1058 = vpop.f32.mrf.mxu0
  %v1059 = vadd.f32 0.0, %v1058
  %v1060 = vpop.f32.mrf.mxu0
  %v1061 = vadd.f32 0.0, %v1060
  %1062 = vdwg.mxu0
  %1063 = vmatprep.subr.mxu0 0.0
  %1064 = vmatpush1.msra.mxu0 0.0
  %1065 = vmatprep.subr.mxu0 0.0
  %1066 = vmatpush1.msra.mxu0 0.0
  %1067 = vmatprep.subr.mxu0 0.0
  %1068 = vmatpush1.msra.mxu0 0.0
  %1069 = vmatprep.subr.mxu0 0.0
  %1070 = vmatpush1.msra.mxu0 0.0
  %1071 = vmatprep.subr.mxu0 0.0
  %1072 = vmatpush1.msra.mxu0 0.0
  %1073 = vmatprep.subr.mxu0 0.0
  %1074 = vmatpush1.msra.mxu0 0.0
  %1075 = vmatprep.subr.mxu0 0.0
  %1076 = vmatpush1.msra.mxu0 0.0
  %1077 = vmatprep.subr.mxu0 0.0
  %1078 = vmatpush1.msra.mxu0 0.0
  %1079 = vmatprep.subr.mxu0 0.0
  %1080 = vmatpush1.msra.mxu0 0.0
  %1081 = vmatprep.subr.mxu0 0.0
  %1082 = vmatpush1.msra.mxu0 0.0
  %1083 = vmatprep.subr.mxu0 0.0
  %1084 = vmatpush1.msra.mxu0 0.0
  %1085 = vmatprep.subr.mxu0 0.0
  %1086 = vmatpush1.msra.mxu0 0.0
  %1087 = vmatprep.subr.mxu0 %v987
  %1088 = vmatpush1.msra.mxu0 %v986
  %1089 = vmatprep.subr.mxu0 %v982
  %1090 = vmatpush1.msra.mxu0 %v981
  %1091 = vmatprep.subr.mxu0 %v977
  %1092 = vmatpush1.msra.mxu0 %v976
  %1093 = vmatprep.subr.mxu0 %v972
  %1094 = vmatpush1.msra.mxu0 %v971
  %1095 = vmatprep.subr.mxu0 0.0
  %1096 = vmatpush2.msra.mxu0 0.0
  %1097 = vmatprep.subr.mxu0 0.0
  %1098 = vmatpush2.msra.mxu0 0.0
  %1099 = vmatprep.subr.mxu0 0.0
  %1100 = vmatpush2.msra.mxu0 0.0
  %1101 = vmatprep.subr.mxu0 0.0
  %1102 = vmatpush2.msra.mxu0 0.0
  %1103 = vmatprep.subr.mxu0 0.0
  %1104 = vmatpush2.msra.mxu0 0.0
  %1105 = vmatprep.subr.mxu0 0.0
  %1106 = vmatpush2.msra.mxu0 0.0
  %1107 = vmatprep.subr.mxu0 0.0
  %1108 = vmatpush2.msra.mxu0 0.0
  %1109 = vmatprep.subr.mxu0 0.0
  %1110 = vmatpush2.msra.mxu0 0.0
  %1111 = vmatprep.subr.mxu0 0.0
  %1112 = vmatpush2.msra.mxu0 0.0
  %1113 = vmatprep.subr.mxu0 0.0
  %1114 = vmatpush2.msra.mxu0 0.0
  %1115 = vmatprep.subr.mxu0 0.0
  %1116 = vmatpush2.msra.mxu0 0.0
  %1117 = vmatprep.subr.mxu0 0.0
  %1118 = vmatpush2.msra.mxu0 0.0
  %1119 = vmatprep.subr.mxu0 0.0
  %1120 = vmatpush2.msra.mxu0 0.0
  %1121 = vmatprep.subr.mxu0 0.0
  %1122 = vmatpush2.msra.mxu0 0.0
  %1123 = vmatprep.subr.mxu0 0.0
  %1124 = vmatpush2.msra.mxu0 0.0
  %1125 = vmatprep.subr.mxu0 0.0
  %1126 = vmatpush2.msra.mxu0 0.0
  %1127 = vmatprep.mubr.f32.mxu0 0.0
  %1128 = vmatmul.mubr.f32.gmra.mxu0 %v990
  %v1129 = vpop.f32.mrf.mxu0
  %v1130 = vadd.f32 0.0, %v1129
  %v1131 = vpop.f32.mrf.mxu0
  %v1132 = vadd.f32 0.0, %v1131
  %1133 = vdwg.mxu0
  %1134 = vmatprep.subr.mxu0 0.0
  %1135 = vmatpush1.msra.mxu0 0.0
  %1136 = vmatprep.subr.mxu0 0.0
  %1137 = vmatpush1.msra.mxu0 0.0
  %1138 = vmatprep.subr.mxu0 0.0
  %1139 = vmatpush1.msra.mxu0 0.0
  %1140 = vmatprep.subr.mxu0 0.0
  %1141 = vmatpush1.msra.mxu0 0.0
  %1142 = vmatprep.subr.mxu0 0.0
  %1143 = vmatpush1.msra.mxu0 0.0
  %1144 = vmatprep.subr.mxu0 0.0
  %1145 = vmatpush1.msra.mxu0 0.0
  %1146 = vmatprep.subr.mxu0 0.0
  %1147 = vmatpush1.msra.mxu0 0.0
  %1148 = vmatprep.subr.mxu0 0.0
  %1149 = vmatpush1.msra.mxu0 0.0
  %1150 = vmatprep.subr.mxu0 0.0
  %1151 = vmatpush1.msra.mxu0 0.0
  %1152 = vmatprep.subr.mxu0 0.0
  %1153 = vmatpush1.msra.mxu0 0.0
  %1154 = vmatprep.subr.mxu0 0.0
  %1155 = vmatpush1.msra.mxu0 0.0
  %1156 = vmatprep.subr.mxu0 0.0
  %1157 = vmatpush1.msra.mxu0 0.0
  %1158 = vmatprep.subr.mxu0 0.0
  %1159 = vmatpush1.msra.mxu0 %v988
  %1160 = vmatprep.subr.mxu0 0.0
  %1161 = vmatpush1.msra.mxu0 %v983
  %1162 = vmatprep.subr.mxu0 0.0
  %1163 = vmatpush1.msra.mxu0 %v978
  %1164 = vmatprep.subr.mxu0 0.0
  %1165 = vmatpush1.msra.mxu0 %v973
  %1166 = vmatprep.subr.mxu0 0.0
  %1167 = vmatpush2.msra.mxu0 0.0
  %1168 = vmatprep.subr.mxu0 0.0
  %1169 = vmatpush2.msra.mxu0 0.0
  %1170 = vmatprep.subr.mxu0 0.0
  %1171 = vmatpush2.msra.mxu0 0.0
  %1172 = vmatprep.subr.mxu0 0.0
  %1173 = vmatpush2.msra.mxu0 0.0
  %1174 = vmatprep.subr.mxu0 0.0
  %1175 = vmatpush2.msra.mxu0 0.0
  %1176 = vmatprep.subr.mxu0 0.0
  %1177 = vmatpush2.msra.mxu0 0.0
  %1178 = vmatprep.subr.mxu0 0.0
  %1179 = vmatpush2.msra.mxu0 0.0
  %1180 = vmatprep.subr.mxu0 0.0
  %1181 = vmatpush2.msra.mxu0 0.0
  %1182 = vmatprep.subr.mxu0 0.0
  %1183 = vmatpush2.msra.mxu0 0.0
  %1184 = vmatprep.subr.mxu0 0.0
  %1185 = vmatpush2.msra.mxu0 0.0
  %1186 = vmatprep.subr.mxu0 0.0
  %1187 = vmatpush2.msra.mxu0 0.0
  %1188 = vmatprep.subr.mxu0 0.0
  %1189 = vmatpush2.msra.mxu0 0.0
  %1190 = vmatprep.subr.mxu0 0.0
  %1191 = vmatpush2.msra.mxu0 0.0
  %1192 = vmatprep.subr.mxu0 0.0
  %1193 = vmatpush2.msra.mxu0 0.0
  %1194 = vmatprep.subr.mxu0 0.0
  %1195 = vmatpush2.msra.mxu0 0.0
  %1196 = vmatprep.subr.mxu0 0.0
  %1197 = vmatpush2.msra.mxu0 0.0
  %1198 = vmatprep.mubr.f32.mxu0 0.0
  %1199 = vmatmul.mubr.f32.gmra.mxu0 %v990
  %v1200 = vpop.f32.mrf.mxu0
  %v1201 = vadd.f32 0.0, %v1200
  %v1202 = vpop.f32.mrf.mxu0
  %1203 = vdwg.mxu0
  %v1205 = vrot.slane %v1059, 6
  %1206 = vrot.lane.b32.xlu0 %v1205, 64
  %v1207 = vpop.permute.xlu0 %1206
  %v1210 = vrot.slane %v1061, 4
  %v1212 = vrot.slane %v1061, 2
  %1213 = vrot.lane.b32.xlu0 %v1212, 64
  %v1214 = vpop.permute.xlu0 %1213
  %v1217 = vrot.slane %v1130, 6
  %1218 = vrot.lane.b32.xlu0 %v1217, 64
  %v1219 = vpop.permute.xlu0 %1218
  %v1222 = vrot.slane %v1132, 4
  %v1224 = vrot.slane %v1132, 2
  %1225 = vrot.lane.b32.xlu0 %v1224, 64
  %v1226 = vpop.permute.xlu0 %1225
  %v1228 = vsel %vm148, %v1059, %v1207
  %vm1229 = vcmask 1043456
  %v1230 = vsel %vm1229, %v1228, %v1210
  %vm1231 = vcmask 1045504
  %v1232 = vsel %vm1231, %v1230, %v1214
  %v1233 = vsel %vm148, %v1130, %v1219
  %v1234 = vsel %vm1229, %v1233, %v1222
  %v1235 = vsel %vm1231, %v1234, %v1226
  %s1236 = scalar_lea.vmem %s3, 72
  %v1237 = vld [vmem:[%s1236] sm:$0xff]
  %v1238 = vld [vmem:[%s1236 + $0x8] sm:$0xff]
  %v1239 = vld [vmem:[%s1236 + $0x10] sm:$0x3]
  %v1241 = vsel %vm36, %v1232, 0
  %v1244 = vsel %vm36, %v1235, 0
  %v1247 = vsel %vm36, %v1201, 0
  %1249 = vmatprep.subr.mxu0 0.0
  %1250 = vmatpush1.msra.mxu0 0.0
  %1251 = vmatprep.subr.mxu0 0.0
  %1252 = vmatpush1.msra.mxu0 0.0
  %1253 = vmatprep.subr.mxu0 0.0
  %1254 = vmatpush1.msra.mxu0 0.0
  %1255 = vmatprep.subr.mxu0 0.0
  %1256 = vmatpush1.msra.mxu0 0.0
  %1257 = vmatprep.subr.mxu0 0.0
  %1258 = vmatpush1.msra.mxu0 0.0
  %1259 = vmatprep.subr.mxu0 0.0
  %1260 = vmatpush1.msra.mxu0 0.0
  %1261 = vmatprep.subr.mxu0 0.0
  %1262 = vmatpush1.msra.mxu0 0.0
  %1263 = vmatprep.subr.mxu0 0.0
  %1264 = vmatpush1.msra.mxu0 0.0
  %1265 = vmatprep.subr.mxu0 0.0
  %1266 = vmatpush1.msra.mxu0 %v29
  %1267 = vmatprep.subr.mxu0 0.0
  %1268 = vmatpush1.msra.mxu0 %v28
  %1269 = vmatprep.subr.mxu0 0.0
  %1270 = vmatpush1.msra.mxu0 %v27
  %1271 = vmatprep.subr.mxu0 0.0
  %1272 = vmatpush1.msra.mxu0 %v26
  %1273 = vmatprep.subr.mxu0 0.0
  %1274 = vmatpush1.msra.mxu0 %v25
  %1275 = vmatprep.subr.mxu0 0.0
  %1276 = vmatpush1.msra.mxu0 %v24
  %1277 = vmatprep.subr.mxu0 0.0
  %1278 = vmatpush1.msra.mxu0 %v23
  %1279 = vmatprep.subr.mxu0 0.0
  %1280 = vmatpush1.msra.mxu0 %v22
  %1281 = vmatprep.subr.mxu0 0.0
  %1282 = vmatpush2.msra.mxu0 0.0
  %1283 = vmatprep.subr.mxu0 0.0
  %1284 = vmatpush2.msra.mxu0 0.0
  %1285 = vmatprep.subr.mxu0 0.0
  %1286 = vmatpush2.msra.mxu0 0.0
  %1287 = vmatprep.subr.mxu0 0.0
  %1288 = vmatpush2.msra.mxu0 0.0
  %1289 = vmatprep.subr.mxu0 0.0
  %1290 = vmatpush2.msra.mxu0 0.0
  %1291 = vmatprep.subr.mxu0 0.0
  %1292 = vmatpush2.msra.mxu0 0.0
  %1293 = vmatprep.subr.mxu0 0.0
  %1294 = vmatpush2.msra.mxu0 0.0
  %1295 = vmatprep.subr.mxu0 0.0
  %1296 = vmatpush2.msra.mxu0 0.0
  %1297 = vmatprep.subr.mxu0 0.0
  %1298 = vmatpush2.msra.mxu0 0.0
  %1299 = vmatprep.subr.mxu0 0.0
  %1300 = vmatpush2.msra.mxu0 0.0
  %1301 = vmatprep.subr.mxu0 0.0
  %1302 = vmatpush2.msra.mxu0 0.0
  %1303 = vmatprep.subr.mxu0 0.0
  %1304 = vmatpush2.msra.mxu0 0.0
  %1305 = vmatprep.subr.mxu0 0.0
  %1306 = vmatpush2.msra.mxu0 0.0
  %1307 = vmatprep.subr.mxu0 0.0
  %1308 = vmatpush2.msra.mxu0 0.0
  %1309 = vmatprep.subr.mxu0 0.0
  %1310 = vmatpush2.msra.mxu0 0.0
  %1311 = vmatprep.subr.mxu0 0.0
  %1312 = vmatpush2.msra.mxu0 0.0
  %1313 = vmatprep.mubr.f32.mxu0 0.0
  %1314 = vmatmul.mubr.f32.gmra.mxu0 %v1241
  %v1315 = vpop.f32.mrf.mxu0
  %v1316 = vadd.f32 0.0, %v1315
  %v1317 = vpop.f32.mrf.mxu0
  %1318 = vmatprep.mubr.f32.mxu0 0.0
  %1319 = vmatmul.mubr.f32.gmra.mxu0 %v1244
  %v1320 = vpop.f32.mrf.mxu0
  %v1321 = vadd.f32 0.0, %v1320
  %v1322 = vpop.f32.mrf.mxu0
  %1323 = vmatprep.mubr.f32.mxu0 0.0
  %1324 = vmatmul.mubr.f32.gmra.mxu0 %v1247
  %v1325 = vpop.f32.mrf.mxu0
  %v1326 = vadd.f32 0.0, %v1325
  %v1327 = vpop.f32.mrf.mxu0
  %1328 = vdwg.mxu0
  %1330 = vset.pattern.permute.xlu0 18
  %1331 = vperm.xlu0 %1330, %v1237
  %v1332 = vpop.permute.xlu0 %1331
  %1335 = vset.pattern.permute.xlu0 18
  %1336 = vperm.xlu0 %1335, %v1238
  %v1337 = vpop.permute.xlu0 %1336
  %1340 = vset.pattern.permute.xlu0 18
  %1341 = vperm.xlu0 %1340, %v1239
  %v1342 = vpop.permute.xlu0 %1341
  %v1344 = vsel %vm141, %v1237, 0
  %v1346 = vsel %vm141, %v1238, 0
  %v1348 = vsel %vm141, %v1239, 0
  %v1351 = vsel %vm148, %v1326, 0
  %1353 = vmatprep.subr.mxu0 0.0
  %1354 = vmatpush1.msra.mxu0 0.0
  %1355 = vmatprep.subr.mxu0 0.0
  %1356 = vmatpush1.msra.mxu0 0.0
  %1357 = vmatprep.subr.mxu0 0.0
  %1358 = vmatpush1.msra.mxu0 0.0
  %1359 = vmatprep.subr.mxu0 0.0
  %1360 = vmatpush1.msra.mxu0 0.0
  %1361 = vmatprep.subr.mxu0 0.0
  %1362 = vmatpush1.msra.mxu0 0.0
  %1363 = vmatprep.subr.mxu0 0.0
  %1364 = vmatpush1.msra.mxu0 0.0
  %1365 = vmatprep.subr.mxu0 0.0
  %1366 = vmatpush1.msra.mxu0 0.0
  %1367 = vmatprep.subr.mxu0 0.0
  %1368 = vmatpush1.msra.mxu0 0.0
  %1369 = vmatprep.subr.mxu0 0.0
  %1370 = vmatpush1.msra.mxu0 0.0
  %1371 = vmatprep.subr.mxu0 0.0
  %1372 = vmatpush1.msra.mxu0 0.0
  %1373 = vmatprep.subr.mxu0 0.0
  %1374 = vmatpush1.msra.mxu0 0.0
  %1375 = vmatprep.subr.mxu0 0.0
  %1376 = vmatpush1.msra.mxu0 0.0
  %1377 = vmatprep.subr.mxu0 0.0
  %1378 = vmatpush1.msra.mxu0 0.0
  %1379 = vmatprep.subr.mxu0 0.0
  %1380 = vmatpush1.msra.mxu0 %v1351
  %1381 = vmatprep.subr.mxu0 0.0
  %1382 = vmatpush1.msra.mxu0 %v1321
  %1383 = vmatprep.subr.mxu0 0.0
  %1384 = vmatpush1.msra.mxu0 %v1316
  %1385 = vmatprep.subr.mxu0 0.0
  %1386 = vmatpush2.msra.mxu0 0.0
  %1387 = vmatprep.subr.mxu0 0.0
  %1388 = vmatpush2.msra.mxu0 0.0
  %1389 = vmatprep.subr.mxu0 0.0
  %1390 = vmatpush2.msra.mxu0 0.0
  %1391 = vmatprep.subr.mxu0 0.0
  %1392 = vmatpush2.msra.mxu0 0.0
  %1393 = vmatprep.subr.mxu0 0.0
  %1394 = vmatpush2.msra.mxu0 0.0
  %1395 = vmatprep.subr.mxu0 0.0
  %1396 = vmatpush2.msra.mxu0 0.0
  %1397 = vmatprep.subr.mxu0 0.0
  %1398 = vmatpush2.msra.mxu0 0.0
  %1399 = vmatprep.subr.mxu0 0.0
  %1400 = vmatpush2.msra.mxu0 0.0
  %1401 = vmatprep.subr.mxu0 0.0
  %1402 = vmatpush2.msra.mxu0 0.0
  %1403 = vmatprep.subr.mxu0 0.0
  %1404 = vmatpush2.msra.mxu0 0.0
  %1405 = vmatprep.subr.mxu0 0.0
  %1406 = vmatpush2.msra.mxu0 0.0
  %1407 = vmatprep.subr.mxu0 0.0
  %1408 = vmatpush2.msra.mxu0 0.0
  %1409 = vmatprep.subr.mxu0 0.0
  %1410 = vmatpush2.msra.mxu0 0.0
  %1411 = vmatprep.subr.mxu0 0.0
  %1412 = vmatpush2.msra.mxu0 0.0
  %1413 = vmatprep.subr.mxu0 0.0
  %1414 = vmatpush2.msra.mxu0 0.0
  %1415 = vmatprep.subr.mxu0 0.0
  %1416 = vmatpush2.msra.mxu0 0.0
  %1417 = vmatprep.mubr.f32.mxu0 0.0
  %1418 = vmatmul.mubr.f32.gmra.mxu0 %v1344
  %v1419 = vpop.f32.mrf.mxu0
  %v1420 = vadd.f32 %v1332, %v1419
  %v1421 = vpop.f32.mrf.mxu0
  %1422 = vmatprep.mubr.f32.mxu0 0.0
  %1423 = vmatmul.mubr.f32.gmra.mxu0 %v1346
  %v1424 = vpop.f32.mrf.mxu0
  %v1425 = vadd.f32 %v1337, %v1424
  %v1426 = vpop.f32.mrf.mxu0
  %1427 = vmatprep.mubr.f32.mxu0 0.0
  %1428 = vmatmul.mubr.f32.gmra.mxu0 %v1348
  %v1429 = vpop.f32.mrf.mxu0
  %v1430 = vadd.f32 %v1342, %v1429
  %v1431 = vpop.f32.mrf.mxu0
  %1432 = vdwg.mxu0
  %v1433 = vmax.f32 %v1420, 0.0
  %v1434 = vmax.f32 %v1425, 0.0
  %v1435 = vmax.f32 %v1430, 0.0
  %s1436 = scalar_lea.vmem %s3, 96
  %v1437 = vld [vmem:[%s1436] sm:$0xff]
  %v1438 = vld [vmem:[%s1436 + $0x8] sm:$0xff]
  %v1439 = vld [vmem:[%s1436 + $0x10] sm:$0x3]
  %v1441 = vsel %vm36, %v1433, 0
  %v1444 = vsel %vm36, %v1434, 0
  %v1447 = vsel %vm36, %v1435, 0
  %1449 = vmatprep.subr.mxu0 0.0
  %1450 = vmatpush1.msra.mxu0 0.0
  %1451 = vmatprep.subr.mxu0 0.0
  %1452 = vmatpush1.msra.mxu0 0.0
  %1453 = vmatprep.subr.mxu0 0.0
  %1454 = vmatpush1.msra.mxu0 0.0
  %1455 = vmatprep.subr.mxu0 0.0
  %1456 = vmatpush1.msra.mxu0 0.0
  %1457 = vmatprep.subr.mxu0 0.0
  %1458 = vmatpush1.msra.mxu0 0.0
  %1459 = vmatprep.subr.mxu0 0.0
  %1460 = vmatpush1.msra.mxu0 0.0
  %1461 = vmatprep.subr.mxu0 0.0
  %1462 = vmatpush1.msra.mxu0 0.0
  %1463 = vmatprep.subr.mxu0 0.0
  %1464 = vmatpush1.msra.mxu0 0.0
  %1465 = vmatprep.subr.mxu0 0.0
  %1466 = vmatpush1.msra.mxu0 %v29
  %1467 = vmatprep.subr.mxu0 0.0
  %1468 = vmatpush1.msra.mxu0 %v28
  %1469 = vmatprep.subr.mxu0 0.0
  %1470 = vmatpush1.msra.mxu0 %v27
  %1471 = vmatprep.subr.mxu0 0.0
  %1472 = vmatpush1.msra.mxu0 %v26
  %1473 = vmatprep.subr.mxu0 0.0
  %1474 = vmatpush1.msra.mxu0 %v25
  %1475 = vmatprep.subr.mxu0 0.0
  %1476 = vmatpush1.msra.mxu0 %v24
  %1477 = vmatprep.subr.mxu0 0.0
  %1478 = vmatpush1.msra.mxu0 %v23
  %1479 = vmatprep.subr.mxu0 0.0
  %1480 = vmatpush1.msra.mxu0 %v22
  %1481 = vmatprep.subr.mxu0 0.0
  %1482 = vmatpush2.msra.mxu0 0.0
  %1483 = vmatprep.subr.mxu0 0.0
  %1484 = vmatpush2.msra.mxu0 0.0
  %1485 = vmatprep.subr.mxu0 0.0
  %1486 = vmatpush2.msra.mxu0 0.0
  %1487 = vmatprep.subr.mxu0 0.0
  %1488 = vmatpush2.msra.mxu0 0.0
  %1489 = vmatprep.subr.mxu0 0.0
  %1490 = vmatpush2.msra.mxu0 0.0
  %1491 = vmatprep.subr.mxu0 0.0
  %1492 = vmatpush2.msra.mxu0 0.0
  %1493 = vmatprep.subr.mxu0 0.0
  %1494 = vmatpush2.msra.mxu0 0.0
  %1495 = vmatprep.subr.mxu0 0.0
  %1496 = vmatpush2.msra.mxu0 0.0
  %1497 = vmatprep.subr.mxu0 0.0
  %1498 = vmatpush2.msra.mxu0 0.0
  %1499 = vmatprep.subr.mxu0 0.0
  %1500 = vmatpush2.msra.mxu0 0.0
  %1501 = vmatprep.subr.mxu0 0.0
  %1502 = vmatpush2.msra.mxu0 0.0
  %1503 = vmatprep.subr.mxu0 0.0
  %1504 = vmatpush2.msra.mxu0 0.0
  %1505 = vmatprep.subr.mxu0 0.0
  %1506 = vmatpush2.msra.mxu0 0.0
  %1507 = vmatprep.subr.mxu0 0.0
  %1508 = vmatpush2.msra.mxu0 0.0
  %1509 = vmatprep.subr.mxu0 0.0
  %1510 = vmatpush2.msra.mxu0 0.0
  %1511 = vmatprep.subr.mxu0 0.0
  %1512 = vmatpush2.msra.mxu0 0.0
  %1513 = vmatprep.mubr.f32.mxu0 0.0
  %1514 = vmatmul.mubr.f32.gmra.mxu0 %v1441
  %v1515 = vpop.f32.mrf.mxu0
  %v1516 = vadd.f32 0.0, %v1515
  %v1517 = vpop.f32.mrf.mxu0
  %1518 = vmatprep.mubr.f32.mxu0 0.0
  %1519 = vmatmul.mubr.f32.gmra.mxu0 %v1444
  %v1520 = vpop.f32.mrf.mxu0
  %v1521 = vadd.f32 0.0, %v1520
  %v1522 = vpop.f32.mrf.mxu0
  %1523 = vmatprep.mubr.f32.mxu0 0.0
  %1524 = vmatmul.mubr.f32.gmra.mxu0 %v1447
  %v1525 = vpop.f32.mrf.mxu0
  %v1526 = vadd.f32 0.0, %v1525
  %v1527 = vpop.f32.mrf.mxu0
  %1528 = vdwg.mxu0
  %1530 = vset.pattern.permute.xlu0 18
  %1531 = vperm.xlu0 %1530, %v1437
  %v1532 = vpop.permute.xlu0 %1531
  %1535 = vset.pattern.permute.xlu0 18
  %1536 = vperm.xlu0 %1535, %v1438
  %v1537 = vpop.permute.xlu0 %1536
  %1540 = vset.pattern.permute.xlu0 18
  %1541 = vperm.xlu0 %1540, %v1439
  %v1542 = vpop.permute.xlu0 %1541
  %v1544 = vsel %vm141, %v1437, 0
  %v1546 = vsel %vm141, %v1438, 0
  %v1548 = vsel %vm141, %v1439, 0
  %v1551 = vsel %vm148, %v1526, 0
  %1553 = vmatprep.subr.mxu0 0.0
  %1554 = vmatpush1.msra.mxu0 0.0
  %1555 = vmatprep.subr.mxu0 0.0
  %1556 = vmatpush1.msra.mxu0 0.0
  %1557 = vmatprep.subr.mxu0 0.0
  %1558 = vmatpush1.msra.mxu0 0.0
  %1559 = vmatprep.subr.mxu0 0.0
  %1560 = vmatpush1.msra.mxu0 0.0
  %1561 = vmatprep.subr.mxu0 0.0
  %1562 = vmatpush1.msra.mxu0 0.0
  %1563 = vmatprep.subr.mxu0 0.0
  %1564 = vmatpush1.msra.mxu0 0.0
  %1565 = vmatprep.subr.mxu0 0.0
  %1566 = vmatpush1.msra.mxu0 0.0
  %1567 = vmatprep.subr.mxu0 0.0
  %1568 = vmatpush1.msra.mxu0 0.0
  %1569 = vmatprep.subr.mxu0 0.0
  %1570 = vmatpush1.msra.mxu0 0.0
  %1571 = vmatprep.subr.mxu0 0.0
  %1572 = vmatpush1.msra.mxu0 0.0
  %1573 = vmatprep.subr.mxu0 0.0
  %1574 = vmatpush1.msra.mxu0 0.0
  %1575 = vmatprep.subr.mxu0 0.0
  %1576 = vmatpush1.msra.mxu0 0.0
  %1577 = vmatprep.subr.mxu0 0.0
  %1578 = vmatpush1.msra.mxu0 0.0
  %1579 = vmatprep.subr.mxu0 0.0
  %1580 = vmatpush1.msra.mxu0 %v1551
  %1581 = vmatprep.subr.mxu0 0.0
  %1582 = vmatpush1.msra.mxu0 %v1521
  %1583 = vmatprep.subr.mxu0 0.0
  %1584 = vmatpush1.msra.mxu0 %v1516
  %1585 = vmatprep.subr.mxu0 0.0
  %1586 = vmatpush2.msra.mxu0 0.0
  %1587 = vmatprep.subr.mxu0 0.0
  %1588 = vmatpush2.msra.mxu0 0.0
  %1589 = vmatprep.subr.mxu0 0.0
  %1590 = vmatpush2.msra.mxu0 0.0
  %1591 = vmatprep.subr.mxu0 0.0
  %1592 = vmatpush2.msra.mxu0 0.0
  %1593 = vmatprep.subr.mxu0 0.0
  %1594 = vmatpush2.msra.mxu0 0.0
  %1595 = vmatprep.subr.mxu0 0.0
  %1596 = vmatpush2.msra.mxu0 0.0
  %1597 = vmatprep.subr.mxu0 0.0
  %1598 = vmatpush2.msra.mxu0 0.0
  %1599 = vmatprep.subr.mxu0 0.0
  %1600 = vmatpush2.msra.mxu0 0.0
  %1601 = vmatprep.subr.mxu0 0.0
  %1602 = vmatpush2.msra.mxu0 0.0
  %1603 = vmatprep.subr.mxu0 0.0
  %1604 = vmatpush2.msra.mxu0 0.0
  %1605 = vmatprep.subr.mxu0 0.0
  %1606 = vmatpush2.msra.mxu0 0.0
  %1607 = vmatprep.subr.mxu0 0.0
  %1608 = vmatpush2.msra.mxu0 0.0
  %1609 = vmatprep.subr.mxu0 0.0
  %1610 = vmatpush2.msra.mxu0 0.0
  %1611 = vmatprep.subr.mxu0 0.0
  %1612 = vmatpush2.msra.mxu0 0.0
  %1613 = vmatprep.subr.mxu0 0.0
  %1614 = vmatpush2.msra.mxu0 0.0
  %1615 = vmatprep.subr.mxu0 0.0
  %1616 = vmatpush2.msra.mxu0 0.0
  %1617 = vmatprep.mubr.f32.mxu0 0.0
  %1618 = vmatmul.mubr.f32.gmra.mxu0 %v1544
  %v1619 = vpop.f32.mrf.mxu0
  %v1620 = vadd.f32 %v1532, %v1619
  %v1621 = vpop.f32.mrf.mxu0
  %1622 = vmatprep.mubr.f32.mxu0 0.0
  %1623 = vmatmul.mubr.f32.gmra.mxu0 %v1546
  %v1624 = vpop.f32.mrf.mxu0
  %v1625 = vadd.f32 %v1537, %v1624
  %v1626 = vpop.f32.mrf.mxu0
  %1627 = vmatprep.mubr.f32.mxu0 0.0
  %1628 = vmatmul.mubr.f32.gmra.mxu0 %v1548
  %v1629 = vpop.f32.mrf.mxu0
  %v1630 = vadd.f32 %v1542, %v1629
  %v1631 = vpop.f32.mrf.mxu0
  %1632 = vdwg.mxu0
  %v1633 = vmax.f32 %v1620, 0.0
  %v1634 = vmax.f32 %v1625, 0.0
  %v1635 = vmax.f32 %v1630, 0.0
  %s1636 = scalar_lea.vmem %s3, 120
  %v1637 = vld [vmem:[%s1636] sm:$0xff]
  %v1638 = vld [vmem:[%s1636 + $0x8] sm:$0xff]
  %v1639 = vld [vmem:[%s1636 + $0x10] sm:$0x3]
  %v1641 = vsel %vm36, %v1633, 0
  %v1644 = vsel %vm36, %v1634, 0
  %v1647 = vsel %vm36, %v1635, 0
  %1649 = vmatprep.subr.mxu0 0.0
  %1650 = vmatpush1.msra.mxu0 0.0
  %1651 = vmatprep.subr.mxu0 0.0
  %1652 = vmatpush1.msra.mxu0 0.0
  %1653 = vmatprep.subr.mxu0 0.0
  %1654 = vmatpush1.msra.mxu0 0.0
  %1655 = vmatprep.subr.mxu0 0.0
  %1656 = vmatpush1.msra.mxu0 0.0
  %1657 = vmatprep.subr.mxu0 0.0
  %1658 = vmatpush1.msra.mxu0 0.0
  %1659 = vmatprep.subr.mxu0 0.0
  %1660 = vmatpush1.msra.mxu0 0.0
  %1661 = vmatprep.subr.mxu0 0.0
  %1662 = vmatpush1.msra.mxu0 0.0
  %1663 = vmatprep.subr.mxu0 0.0
  %1664 = vmatpush1.msra.mxu0 0.0
  %1665 = vmatprep.subr.mxu0 0.0
  %1666 = vmatpush1.msra.mxu0 %v29
  %1667 = vmatprep.subr.mxu0 0.0
  %1668 = vmatpush1.msra.mxu0 %v28
  %1669 = vmatprep.subr.mxu0 0.0
  %1670 = vmatpush1.msra.mxu0 %v27
  %1671 = vmatprep.subr.mxu0 0.0
  %1672 = vmatpush1.msra.mxu0 %v26
  %1673 = vmatprep.subr.mxu0 0.0
  %1674 = vmatpush1.msra.mxu0 %v25
  %1675 = vmatprep.subr.mxu0 0.0
  %1676 = vmatpush1.msra.mxu0 %v24
  %1677 = vmatprep.subr.mxu0 0.0
  %1678 = vmatpush1.msra.mxu0 %v23
  %1679 = vmatprep.subr.mxu0 0.0
  %1680 = vmatpush1.msra.mxu0 %v22
  %1681 = vmatprep.subr.mxu0 0.0
  %1682 = vmatpush2.msra.mxu0 0.0
  %1683 = vmatprep.subr.mxu0 0.0
  %1684 = vmatpush2.msra.mxu0 0.0
  %1685 = vmatprep.subr.mxu0 0.0
  %1686 = vmatpush2.msra.mxu0 0.0
  %1687 = vmatprep.subr.mxu0 0.0
  %1688 = vmatpush2.msra.mxu0 0.0
  %1689 = vmatprep.subr.mxu0 0.0
  %1690 = vmatpush2.msra.mxu0 0.0
  %1691 = vmatprep.subr.mxu0 0.0
  %1692 = vmatpush2.msra.mxu0 0.0
  %1693 = vmatprep.subr.mxu0 0.0
  %1694 = vmatpush2.msra.mxu0 0.0
  %1695 = vmatprep.subr.mxu0 0.0
  %1696 = vmatpush2.msra.mxu0 0.0
  %1697 = vmatprep.subr.mxu0 0.0
  %1698 = vmatpush2.msra.mxu0 0.0
  %1699 = vmatprep.subr.mxu0 0.0
  %1700 = vmatpush2.msra.mxu0 0.0
  %1701 = vmatprep.subr.mxu0 0.0
  %1702 = vmatpush2.msra.mxu0 0.0
  %1703 = vmatprep.subr.mxu0 0.0
  %1704 = vmatpush2.msra.mxu0 0.0
  %1705 = vmatprep.subr.mxu0 0.0
  %1706 = vmatpush2.msra.mxu0 0.0
  %1707 = vmatprep.subr.mxu0 0.0
  %1708 = vmatpush2.msra.mxu0 0.0
  %1709 = vmatprep.subr.mxu0 0.0
  %1710 = vmatpush2.msra.mxu0 0.0
  %1711 = vmatprep.subr.mxu0 0.0
  %1712 = vmatpush2.msra.mxu0 0.0
  %1713 = vmatprep.mubr.f32.mxu0 0.0
  %1714 = vmatmul.mubr.f32.gmra.mxu0 %v1641
  %v1715 = vpop.f32.mrf.mxu0
  %v1716 = vadd.f32 0.0, %v1715
  %v1717 = vpop.f32.mrf.mxu0
  %1718 = vmatprep.mubr.f32.mxu0 0.0
  %1719 = vmatmul.mubr.f32.gmra.mxu0 %v1644
  %v1720 = vpop.f32.mrf.mxu0
  %v1721 = vadd.f32 0.0, %v1720
  %v1722 = vpop.f32.mrf.mxu0
  %1723 = vmatprep.mubr.f32.mxu0 0.0
  %1724 = vmatmul.mubr.f32.gmra.mxu0 %v1647
  %v1725 = vpop.f32.mrf.mxu0
  %v1726 = vadd.f32 0.0, %v1725
  %v1727 = vpop.f32.mrf.mxu0
  %1728 = vdwg.mxu0
  %1730 = vset.pattern.permute.xlu0 18
  %1731 = vperm.xlu0 %1730, %v1637
  %v1732 = vpop.permute.xlu0 %1731
  %1735 = vset.pattern.permute.xlu0 18
  %1736 = vperm.xlu0 %1735, %v1638
  %v1737 = vpop.permute.xlu0 %1736
  %1740 = vset.pattern.permute.xlu0 18
  %1741 = vperm.xlu0 %1740, %v1639
  %v1742 = vpop.permute.xlu0 %1741
  %v1744 = vsel %vm141, %v1637, 0
  %v1746 = vsel %vm141, %v1638, 0
  %v1748 = vsel %vm141, %v1639, 0
  %v1751 = vsel %vm148, %v1726, 0
  %1753 = vmatprep.subr.mxu0 0.0
  %1754 = vmatpush1.msra.mxu0 0.0
  %1755 = vmatprep.subr.mxu0 0.0
  %1756 = vmatpush1.msra.mxu0 0.0
  %1757 = vmatprep.subr.mxu0 0.0
  %1758 = vmatpush1.msra.mxu0 0.0
  %1759 = vmatprep.subr.mxu0 0.0
  %1760 = vmatpush1.msra.mxu0 0.0
  %1761 = vmatprep.subr.mxu0 0.0
  %1762 = vmatpush1.msra.mxu0 0.0
  %1763 = vmatprep.subr.mxu0 0.0
  %1764 = vmatpush1.msra.mxu0 0.0
  %1765 = vmatprep.subr.mxu0 0.0
  %1766 = vmatpush1.msra.mxu0 0.0
  %1767 = vmatprep.subr.mxu0 0.0
  %1768 = vmatpush1.msra.mxu0 0.0
  %1769 = vmatprep.subr.mxu0 0.0
  %1770 = vmatpush1.msra.mxu0 0.0
  %1771 = vmatprep.subr.mxu0 0.0
  %1772 = vmatpush1.msra.mxu0 0.0
  %1773 = vmatprep.subr.mxu0 0.0
  %1774 = vmatpush1.msra.mxu0 0.0
  %1775 = vmatprep.subr.mxu0 0.0
  %1776 = vmatpush1.msra.mxu0 0.0
  %1777 = vmatprep.subr.mxu0 0.0
  %1778 = vmatpush1.msra.mxu0 0.0
  %1779 = vmatprep.subr.mxu0 0.0
  %1780 = vmatpush1.msra.mxu0 %v1751
  %1781 = vmatprep.subr.mxu0 0.0
  %1782 = vmatpush1.msra.mxu0 %v1721
  %1783 = vmatprep.subr.mxu0 0.0
  %1784 = vmatpush1.msra.mxu0 %v1716
  %1785 = vmatprep.subr.mxu0 0.0
  %1786 = vmatpush2.msra.mxu0 0.0
  %1787 = vmatprep.subr.mxu0 0.0
  %1788 = vmatpush2.msra.mxu0 0.0
  %1789 = vmatprep.subr.mxu0 0.0
  %1790 = vmatpush2.msra.mxu0 0.0
  %1791 = vmatprep.subr.mxu0 0.0
  %1792 = vmatpush2.msra.mxu0 0.0
  %1793 = vmatprep.subr.mxu0 0.0
  %1794 = vmatpush2.msra.mxu0 0.0
  %1795 = vmatprep.subr.mxu0 0.0
  %1796 = vmatpush2.msra.mxu0 0.0
  %1797 = vmatprep.subr.mxu0 0.0
  %1798 = vmatpush2.msra.mxu0 0.0
  %1799 = vmatprep.subr.mxu0 0.0
  %1800 = vmatpush2.msra.mxu0 0.0
  %1801 = vmatprep.subr.mxu0 0.0
  %1802 = vmatpush2.msra.mxu0 0.0
  %1803 = vmatprep.subr.mxu0 0.0
  %1804 = vmatpush2.msra.mxu0 0.0
  %1805 = vmatprep.subr.mxu0 0.0
  %1806 = vmatpush2.msra.mxu0 0.0
  %1807 = vmatprep.subr.mxu0 0.0
  %1808 = vmatpush2.msra.mxu0 0.0
  %1809 = vmatprep.subr.mxu0 0.0
  %1810 = vmatpush2.msra.mxu0 0.0
  %1811 = vmatprep.subr.mxu0 0.0
  %1812 = vmatpush2.msra.mxu0 0.0
  %1813 = vmatprep.subr.mxu0 0.0
  %1814 = vmatpush2.msra.mxu0 0.0
  %1815 = vmatprep.subr.mxu0 0.0
  %1816 = vmatpush2.msra.mxu0 0.0
  %1817 = vmatprep.mubr.f32.mxu0 0.0
  %1818 = vmatmul.mubr.f32.gmra.mxu0 %v1744
  %v1819 = vpop.f32.mrf.mxu0
  %v1820 = vadd.f32 %v1732, %v1819
  %v1821 = vpop.f32.mrf.mxu0
  %1822 = vmatprep.mubr.f32.mxu0 0.0
  %1823 = vmatmul.mubr.f32.gmra.mxu0 %v1746
  %v1824 = vpop.f32.mrf.mxu0
  %v1825 = vadd.f32 %v1737, %v1824
  %v1826 = vpop.f32.mrf.mxu0
  %1827 = vmatprep.mubr.f32.mxu0 0.0
  %1828 = vmatmul.mubr.f32.gmra.mxu0 %v1748
  %v1829 = vpop.f32.mrf.mxu0
  %v1830 = vadd.f32 %v1742, %v1829
  %v1831 = vpop.f32.mrf.mxu0
  %1832 = vdwg.mxu0
  %v1833 = vtanh.pop %v1820
  %v1834 = vtanh.pop %v1825
  %v1835 = vtanh.pop %v1830
  %1836 = vst.msk [vmem:[%s6] sm:$0xff] %vm36, %v1833
  %1837 = vst.msk [vmem:[%s6 + $0x8] sm:$0xff] %vm36, %v1834
  %vm1838 = vcmask 517120
  %1839 = vst.msk [vmem:[%s6 + $0x10] sm:$0x3] %vm1838, %v1835
  // Predicated region
  $region22: #{geovae_forward.1} parent=0 // pred_check
    _
  $region23: #{geovae_forward.1} parent=0 // pred_check_branch
    %1841 = sbr.rel (0) target = $region25
  $region24: #{geovae_forward.1} parent=0 // pred_region
    _
  $region25: #{geovae_forward.1} parent=0 // pred_fallthru
    _
  // Predicated region
  $region26: #{geovae_forward.1} parent=0 // pred_check
    _
  $region27: #{geovae_forward.1} parent=0 // pred_check_branch
    %1843 = sbr.rel (0) target = $region29
  $region28: #{geovae_forward.1} parent=0 // pred_region
    _
  $region29: #{geovae_forward.1} parent=0 // pred_fallthru
    _
  // Predicated region
  $region30: #{geovae_forward.1} parent=0 // pred_check
    _
  $region31: #{geovae_forward.1} parent=0 // pred_check_branch
    %1845 = sbr.rel (0) target = $region33
  $region32: #{geovae_forward.1} parent=0 // pred_region
    _
  $region33: #{geovae_forward.1} parent=0 // pred_fallthru
    _
  // Predicated region
  $region34: #{geovae_forward.1} parent=0 // pred_check
    _
  $region35: #{geovae_forward.1} parent=0 // pred_check_branch
    %1847 = sbr.rel (0) target = $region37
  $region36: #{geovae_forward.1} parent=0 // pred_region
    _
  $region37: #{geovae_forward.1} parent=0 // pred_fallthru
    _

</llo_original>
